<compile_context>
chip_gen: v7x
topology: tpu7x:2x2x1
jax: 0.10.0
libtpu: 0.0.40
codegen_flags: <defaults>
</compile_context>

<pallas_src>
import functools

import jax
import jax.numpy as jnp
from jax.experimental import pallas as pl
from jax.experimental.pallas import tpu as pltpu

BN_EPS = 1e-5
ACT_DTYPE = jnp.bfloat16           # activation / MXU-input dtype


def _vmem_limit_bytes():
    try:
        cap = int(pltpu.get_tpu_info().vmem_capacity_bytes)
    except Exception:
        return 32 * 1024 * 1024
    return max(32 * 1024 * 1024, min(cap // 2, 96 * 1024 * 1024))


VMEM_LIMIT = _vmem_limit_bytes()


# ----------------------------------------------------------------------------
# tile-size helpers
# ----------------------------------------------------------------------------
def _pick_ch_tile(dim, max_tile):
    """Channel (lane) tile: full dim if small, else a multiple of 128 dividing dim."""
    if dim <= max_tile:
        return dim
    t = (max_tile // 128) * 128
    while t >= 128:
        if dim % t == 0:
            return t
        t -= 128
    return dim


def _pick_m_tile(m, max_tile=1024):
    """Row tile: full dim if small, else a multiple of 8 dividing m."""
    if m <= max_tile:
        return m
    t = (max_tile // 8) * 8
    while t >= 8:
        if m % t == 0:
            return t
        t -= 8
    return m


def _pick_hb(ho, pw):
    """Output rows per 3x3-conv grid step: whole image if small, else 8/16."""
    if ho <= 16:
        return ho
    for hb in (16, 8):
        if ho % hb == 0:
            return hb
    for hb in range(min(ho, 32), 0, -1):
        if ho % hb == 0 and (hb * pw) % 8 == 0:
            return hb
    return ho


# ----------------------------------------------------------------------------
# Pallas kernels
# ----------------------------------------------------------------------------
def _matmul_stats_kernel(x_ref, w_ref, y_ref, sum_ref, sq_ref):
    """1x1 conv tile: (tm,K)x(K,tn) matmul, bf16 output, per-m-block stats."""
    acc = jnp.dot(x_ref[...], w_ref[...], preferred_element_type=jnp.float32)
    y_ref[...] = acc.astype(y_ref.dtype)
    sum_ref[0] = jnp.sum(acc, axis=0, keepdims=True)
    sq_ref[0] = jnp.sum(acc * acc, axis=0, keepdims=True)


def _conv3x3_kernel(*refs, taps, pw, wo, hb, nhb):
    """3x3 conv on a block of `hb` output rows in the padded-width raster.

    refs = plane_refs..., w_ref, y_ref, sum_ref, sq_ref.
    Each tap is one contiguous-slab matmul of M = hb*pw rows (MXU-friendly).
    The raster has pw columns per row, of which the first `wo` are valid; the
    tail columns are finite garbage that is masked out of the statistics and
    stripped by the BN-apply kernel.
    """
    nplanes = len(refs) - 4
    planes = refs[:nplanes]
    w_ref = refs[nplanes]
    y_ref, sum_ref, sq_ref = refs[nplanes + 1:]

    ho0 = 0 if nhb == 1 else pl.program_id(2) * hb
    m = hb * pw
    tn = w_ref.shape[-1]

    acc = jnp.zeros((m, tn), jnp.float32)
    for (p, ky, kx, dr, dc) in taps:
        start = (ho0 + dr) * pw + dc
        xs = planes[p][0, pl.ds(start, m), :]
        acc = acc + jnp.dot(xs, w_ref[ky, kx],
                            preferred_element_type=jnp.float32)

    y_ref[0] = acc.astype(y_ref.dtype)

    col = jax.lax.broadcasted_iota(jnp.int32, (m, 1), 0) % pw
    valid = col < wo
    sum_ref[0] = jnp.sum(jnp.where(valid, acc, 0.0), axis=0, keepdims=True)
    sq_ref[0] = jnp.sum(jnp.where(valid, acc * acc, 0.0), axis=0, keepdims=True)


def _bn_scale_shift_kernel(sum_ref, sq_ref, g_ref, b_ref, scale_ref, shift_ref,
                           *, count):
    """Fold per-block stats into per-channel BN scale/shift (batch statistics)."""
    s = jnp.sum(sum_ref[...], axis=0)          # (1, tn)
    q = jnp.sum(sq_ref[...], axis=0)           # (1, tn)
    inv = 1.0 / count
    mean = s * inv
    var = jnp.maximum(q * inv - mean * mean, 0.0)
    scale = jax.lax.rsqrt(var + BN_EPS) * g_ref[...]
    scale_ref[...] = scale
    shift_ref[...] = b_ref[...] - mean * scale


def _bn_apply2d_kernel(y_ref, scale_ref, shift_ref, *rest, relu, has_res):
    """Elementwise BN affine [+ residual] [+ ReLU] on (tm, tn) tiles -> bf16."""
    if has_res:
        res_ref, o_ref = rest
    else:
        (o_ref,) = rest
    out = y_ref[...].astype(jnp.float32) * scale_ref[...] + shift_ref[...]
    if has_res:
        out = out + res_ref[...].astype(jnp.float32)
    if relu:
        out = jnp.maximum(out, 0.0)
    o_ref[...] = out.astype(o_ref.dtype)


def _bn_apply_strip_kernel(y_ref, scale_ref, shift_ref, o_ref, *, wo, relu):
    """BN affine [+ ReLU] on the padded-width conv raster, stripping the
    garbage tail columns while writing the clean NHWC output."""
    v = y_ref[0, :, 0:wo, :].astype(jnp.float32)        # (Hb, wo, tn)
    scale = scale_ref[...].reshape(1, 1, -1)
    shift = shift_ref[...].reshape(1, 1, -1)
    out = v * scale + shift
    if relu:
        out = jnp.maximum(out, 0.0)
    o_ref[0] = out.astype(o_ref.dtype)


def _maxpool_kernel(a_ref, b_ref, c_ref, d_ref, o_ref, *, ho, wo):
    """3x3 stride-2 pad-1 max pool from parity quadrants (one image/step)."""
    A = a_ref[0]          # even rows, even cols   (Ho+1, Wo+1, C)
    B = b_ref[0]          # even rows, odd  cols
    C = c_ref[0]          # odd  rows, even cols
    D = d_ref[0]          # odd  rows, odd  cols
    ev = jnp.maximum(jnp.maximum(A[:, :wo], A[:, 1:wo + 1]), B[:, :wo])
    od = jnp.maximum(jnp.maximum(C[:, :wo], C[:, 1:wo + 1]), D[:, :wo])
    o_ref[0] = jnp.maximum(jnp.maximum(ev[:ho], ev[1:ho + 1]), od[:ho])


def _head_kernel(x_ref, w_ref, b_ref, o_ref):
    """Global average pool + fc on a batch tile."""
    x = x_ref[...].astype(jnp.float32)           # (tb, H*W, C)
    pooled = jnp.mean(x, axis=1)                 # (tb, C)
    o_ref[...] = jnp.dot(pooled, w_ref[...],
                         preferred_element_type=jnp.float32) + b_ref[...]


# ----------------------------------------------------------------------------
# Pallas wrappers
# ----------------------------------------------------------------------------
def _matmul_stats(x2, w2):
    """x2:(M,K) bf16, w2:(K,Cout) bf16 -> y:(M,Cout) bf16, stats:(nm,1,Cout) f32."""
    M, K = x2.shape
    Cout = w2.shape[1]
    tm = _pick_m_tile(M, 1024)
    tn = _pick_ch_tile(Cout, 512)
    nm, nco = M // tm, Cout // tn
    cost = pl.CostEstimate(flops=2 * M * K * Cout, transcendentals=0,
                           bytes_accessed=M * K * 2 + nm * K * Cout * 2
                           + M * Cout * 2 + 2 * nm * Cout * 4)
    return pl.pallas_call(
        _matmul_stats_kernel,
        out_shape=(jax.ShapeDtypeStruct((M, Cout), ACT_DTYPE),
                   jax.ShapeDtypeStruct((nm, 1, Cout), jnp.float32),
                   jax.ShapeDtypeStruct((nm, 1, Cout), jnp.float32)),
        grid=(nm, nco),
        in_specs=[pl.BlockSpec((tm, K), lambda m, co: (m, 0)),
                  pl.BlockSpec((K, tn), lambda m, co: (0, co))],
        out_specs=(pl.BlockSpec((tm, tn), lambda m, co: (m, co)),
                   pl.BlockSpec((1, 1, tn), lambda m, co: (m, 0, co)),
                   pl.BlockSpec((1, 1, tn), lambda m, co: (m, 0, co))),
        compiler_params=pltpu.CompilerParams(
            dimension_semantics=("parallel", "parallel"),
            vmem_limit_bytes=VMEM_LIMIT),
        cost_estimate=cost,
    )(x2, w2)


def _bn_scale_shift(s, sq, gamma, beta, count):
    """(R,1,Cout) partial stats -> per-channel scale/shift, each (1, Cout) f32."""
    R, _, Cout = s.shape
    tn = _pick_ch_tile(Cout, 512)
    nco = Cout // tn
    kernel = functools.partial(_bn_scale_shift_kernel, count=float(count))
    return pl.pallas_call(
        kernel,
        out_shape=(jax.ShapeDtypeStruct((1, Cout), jnp.float32),
                   jax.ShapeDtypeStruct((1, Cout), jnp.float32)),
        grid=(nco,),
        in_specs=[pl.BlockSpec((R, 1, tn), lambda co: (0, 0, co)),
                  pl.BlockSpec((R, 1, tn), lambda co: (0, 0, co)),
                  pl.BlockSpec((1, tn), lambda co: (0, co)),
                  pl.BlockSpec((1, tn), lambda co: (0, co))],
        out_specs=(pl.BlockSpec((1, tn), lambda co: (0, co)),
                   pl.BlockSpec((1, tn), lambda co: (0, co))),
        compiler_params=pltpu.CompilerParams(
            dimension_semantics=("parallel",),
            vmem_limit_bytes=VMEM_LIMIT),
    )(s, sq,
      gamma.reshape(1, Cout).astype(jnp.float32),
      beta.reshape(1, Cout).astype(jnp.float32))


def _bn_apply2d(y, scale, shift, relu, residual=None):
    """Tiled BN affine [+residual] [+ReLU] on (M, Cout) -> bf16."""
    M, Cout = y.shape
    tm = _pick_m_tile(M, 2048)
    tn = _pick_ch_tile(Cout, 512)
    nm, nco = M // tm, Cout // tn
    kernel = functools.partial(_bn_apply2d_kernel, relu=relu,
                               has_res=residual is not None)
    in_specs = [pl.BlockSpec((tm, tn), lambda m, co: (m, co)),
                pl.BlockSpec((1, tn), lambda m, co: (0, co)),
                pl.BlockSpec((1, tn), lambda m, co: (0, co))]
    args = [y, scale, shift]
    if residual is not None:
        in_specs.append(pl.BlockSpec((tm, tn), lambda m, co: (m, co)))
        args.append(residual)
    return pl.pallas_call(
        kernel,
        out_shape=jax.ShapeDtypeStruct((M, Cout), ACT_DTYPE),
        grid=(nm, nco),
        in_specs=in_specs,
        out_specs=pl.BlockSpec((tm, tn), lambda m, co: (m, co)),
        compiler_params=pltpu.CompilerParams(
            dimension_semantics=("parallel", "parallel"),
            vmem_limit_bytes=VMEM_LIMIT),
    )(*args)


def _bn_apply_strip(y_raster, scale, shift, n, ho, pw, wo, relu):
    """BN affine [+ReLU] on the (N, Ho*pw, Cout) conv raster -> clean NHWC bf16."""
    Cout = y_raster.shape[-1]
    y4 = y_raster.reshape(n, ho, pw, Cout)
    tn = _pick_ch_tile(Cout, 512)
    nco = Cout // tn
    kernel = functools.partial(_bn_apply_strip_kernel, wo=wo, relu=relu)
    return pl.pallas_call(
        kernel,
        out_shape=jax.ShapeDtypeStruct((n, ho, wo, Cout), ACT_DTYPE),
        grid=(n, nco),
        in_specs=[pl.BlockSpec((1, ho, pw, tn), lambda b, co: (b, 0, 0, co)),
                  pl.BlockSpec((1, tn), lambda b, co: (0, co)),
                  pl.BlockSpec((1, tn), lambda b, co: (0, co))],
        out_specs=pl.BlockSpec((1, ho, wo, tn), lambda b, co: (b, 0, 0, co)),
        compiler_params=pltpu.CompilerParams(
            dimension_semantics=("parallel", "parallel"),
            vmem_limit_bytes=VMEM_LIMIT),
    )(y4, scale, shift)


def _conv3x3_stats(x, w4, stride, tk, tn, ci_of_co):
    """Row-blocked 3x3 conv on flattened padded planes.

    x:(N,H,W,Cin) bf16, w4:(3,3,tk,Cout) bf16 -> y raster (N, Ho*pw, Cout) bf16,
    per-(n,row-block) stats (N*nhb, 1, Cout) f32.
    """
    N, H, W, Cin = x.shape
    Cout = w4.shape[-1]

    if stride == 1:
        Ho, Wo = H, W
        pw = W + 2                               # raster / plane width
        hp = H + 3                               # 1 top, 2 bottom pad rows
        xp = jnp.pad(x, ((0, 0), (1, 2), (1, 1), (0, 0)))
        planes = [xp.reshape(N, hp * pw, Cin)]
        taps = [(0, ky, kx, ky, kx) for ky in range(3) for kx in range(3)]
    else:                                        # stride == 2
        Ho = (H - 1) // 2 + 1
        Wo = (W - 1) // 2 + 1
        pw = Wo + 1                              # parity-plane width == raster width
        hq = Ho + 2
        hp2, wp2 = 2 * hq, 2 * pw
        xp = jnp.pad(x, ((0, 0), (1, hp2 - H - 1), (1, wp2 - W - 1), (0, 0)))
        planes = [xp[:, a::2, b::2, :].reshape(N, hq * pw, Cin)
                  for a in range(2) for b in range(2)]
        taps = [(2 * (ky % 2) + (kx % 2), ky, kx, ky // 2, kx // 2)
                for ky in range(3) for kx in range(3)]

    hb = _pick_hb(Ho, pw)
    nhb = Ho // hb
    nco = Cout // tn
    plane_len = planes[0].shape[1]

    kernel = functools.partial(_conv3x3_kernel, taps=taps, pw=pw, wo=Wo,
                               hb=hb, nhb=nhb)
    x_spec = pl.BlockSpec((1, plane_len, tk),
                          lambda co, n, h: (n, 0, ci_of_co(co)))
    w_spec = pl.BlockSpec((3, 3, tk, tn), lambda co, n, h: (0, 0, 0, co))
    y_spec = pl.BlockSpec((1, hb * pw, tn), lambda co, n, h: (n, h, co))
    s_spec = pl.BlockSpec((1, 1, tn), lambda co, n, h: (n * nhb + h, 0, co))

    cost = pl.CostEstimate(
        flops=2 * N * Ho * pw * 9 * tk * Cout, transcendentals=0,
        bytes_accessed=(nco * N * plane_len * tk * 2 + 9 * tk * Cout * 2
                        + N * Ho * pw * Cout * 2 + 2 * N * nhb * Cout * 4))

    y, s, sq = pl.pallas_call(
        kernel,
        out_shape=(jax.ShapeDtypeStruct((N, Ho * pw, Cout), ACT_DTYPE),
                   jax.ShapeDtypeStruct((N * nhb, 1, Cout), jnp.float32),
                   jax.ShapeDtypeStruct((N * nhb, 1, Cout), jnp.float32)),
        grid=(nco, N, nhb),
        in_specs=[x_spec] * len(planes) + [w_spec],
        out_specs=(y_spec, s_spec, s_spec),
        compiler_params=pltpu.CompilerParams(
            dimension_semantics=("parallel", "parallel", "parallel"),
            vmem_limit_bytes=VMEM_LIMIT),
        cost_estimate=cost,
    )(*planes, w4)
    return y, s, sq, (N, Ho, Wo, pw)


def maxpool3x3_s2_p1(x):
    """MaxPool2d(kernel=3, stride=2, padding=1) on NHWC via parity quadrants."""
    N, H, W, C = x.shape
    Ho = (H - 1) // 2 + 1
    Wo = (W - 1) // 2 + 1
    Hp, Wp = 2 * Ho + 2, 2 * Wo + 2
    xp = jnp.pad(x, ((0, 0), (1, Hp - H - 1), (1, Wp - W - 1), (0, 0)),
                 constant_values=-jnp.inf)
    quads = (xp[:, 0::2, 0::2, :], xp[:, 0::2, 1::2, :],
             xp[:, 1::2, 0::2, :], xp[:, 1::2, 1::2, :])
    Hh, Wh = Ho + 1, Wo + 1
    kernel = functools.partial(_maxpool_kernel, ho=Ho, wo=Wo)
    qspec = pl.BlockSpec((1, Hh, Wh, C), lambda n: (n, 0, 0, 0))
    return pl.pallas_call(
        kernel,
        out_shape=jax.ShapeDtypeStruct((N, Ho, Wo, C), x.dtype),
        grid=(N,),
        in_specs=[qspec] * 4,
        out_specs=pl.BlockSpec((1, Ho, Wo, C), lambda n: (n, 0, 0, 0)),
        compiler_params=pltpu.CompilerParams(
            dimension_semantics=("parallel",),
            vmem_limit_bytes=VMEM_LIMIT),
    )(*quads)


def head(x, fc_w, fc_b):
    """Global average pool + flatten + fc, tiled over the batch axis."""
    N, H, W, C = x.shape
    x3 = x.reshape(N, H * W, C)
    w = jnp.transpose(fc_w).astype(jnp.float32)           # (C, num_classes)
    b = fc_b.reshape(1, -1).astype(jnp.float32)
    nclass = w.shape[1]
    tb = _pick_m_tile(N, 8)
    nb = N // tb
    return pl.pallas_call(
        _head_kernel,
        out_shape=jax.ShapeDtypeStruct((N, nclass), jnp.float32),
        grid=(nb,),
        in_specs=[pl.BlockSpec((tb, H * W, C), lambda i: (i, 0, 0)),
                  pl.BlockSpec((C, nclass), lambda i: (0, 0)),
                  pl.BlockSpec((1, nclass), lambda i: (0, 0))],
        out_specs=pl.BlockSpec((tb, nclass), lambda i: (i, 0)),
        compiler_params=pltpu.CompilerParams(
            dimension_semantics=("parallel",),
            vmem_limit_bytes=VMEM_LIMIT),
    )(x3, w, b)


# ----------------------------------------------------------------------------
# Layer-level glue (weight layout conversion is pure data movement)
# ----------------------------------------------------------------------------
def _w3x3_blockdiag(w, groups):
    """PyTorch grouped (Cout, Cin/G, 3, 3) -> block-diagonal (3, 3, Cin, Cout) bf16."""
    Cout, Cg, kh, kw = w.shape
    Ng = Cout // groups
    w5 = w.reshape(groups, Ng, Cg, kh, kw).transpose(3, 4, 0, 2, 1)  # (kh,kw,G,Cg,Ng)
    eye = jnp.eye(groups, dtype=w.dtype)
    wd = jnp.einsum('yxgcn,gh->yxgchn', w5, eye)
    return wd.reshape(kh, kw, groups * Cg, groups * Ng).astype(ACT_DTYPE)


def conv1x1_bn(x, w, gamma, beta, stride=1, relu=True, residual=None):
    if stride > 1:
        x = x[:, ::stride, ::stride, :]            # 1x1 stride-s = subsample (glue)
    N, H, W, Cin = x.shape
    Cout = w.shape[0]
    M = N * H * W
    x2 = x.reshape(M, Cin).astype(ACT_DTYPE)
    w2 = jnp.transpose(w[:, :, 0, 0]).astype(ACT_DTYPE)
    y2, s, sq = _matmul_stats(x2, w2)
    scale, shift = _bn_scale_shift(s, sq, gamma, beta, M)
    res2 = (residual.reshape(M, Cout).astype(ACT_DTYPE)
            if residual is not None else None)
    out2 = _bn_apply2d(y2, scale, shift, relu, res2)
    return out2.reshape(N, H, W, Cout)


def conv3x3_bn(x, w, gamma, beta, stride=1, groups=1, relu=True):
    """3x3 conv (padding=1) + BN(batch stats) + optional ReLU."""
    N, H, W, Cin = x.shape
    Cout, Cg = w.shape[0], w.shape[1]
    Ng = Cout // groups
    x = x.astype(ACT_DTYPE)
    tn = _pick_ch_tile(Cout, 256)

    if groups == 1:
        w4 = jnp.transpose(w, (2, 3, 1, 0)).astype(ACT_DTYPE)   # (3,3,Cin,Cout)
        tk, ci_of_co = Cin, (lambda co: 0)
    elif Cg % 128 == 0 and tn % 128 == 0 and Ng % tn == 0:
        # Wide groups: skip the zero blocks entirely (ci block derived from co).
        w4 = jnp.transpose(w, (2, 3, 1, 0)).astype(ACT_DTYPE)   # (3,3,Cg,Cout)
        cpg = Ng // tn
        tk, ci_of_co = Cg, (lambda co: co // cpg)
    else:
        # Narrow groups: dense block-diagonal keeps the MXU full (a true grouped
        # matmul with Ng<128 would starve lanes/MXU far worse than G x FLOPs).
        w4 = _w3x3_blockdiag(w, groups)                          # (3,3,Cin,Cout)
        tk, ci_of_co = Cin, (lambda co: 0)

    y, s, sq, (n, ho, wo, pw) = _conv3x3_stats(x, w4, stride, tk, tn, ci_of_co)
    scale, shift = _bn_scale_shift(s, sq, gamma, beta, n * ho * wo)
    return _bn_apply_strip(y, scale, shift, n, ho, pw, wo, relu)


def stem_conv_bn(x, w, gamma, beta):
    """Stem: 3x3 s1 p1, Cin=3 -> K=27 im2col + matmul path (MXU/lane friendly)."""
    N, H, W, C = x.shape
    xp = jnp.pad(x, ((0, 0), (1, 1), (1, 1), (0, 0)))
    cols = [xp[:, dy:dy + H, dx:dx + W, :] for dy in range(3) for dx in range(3)]
    xi = jnp.concatenate(cols, axis=-1).astype(ACT_DTYPE)        # (N,H,W,9*C)
    Cout = w.shape[0]
    w2 = jnp.transpose(w, (2, 3, 1, 0)).reshape(9 * C, Cout).astype(ACT_DTYPE)
    M = N * H * W
    y2, s, sq = _matmul_stats(xi.reshape(M, 9 * C), w2)
    scale, shift = _bn_scale_shift(s, sq, gamma, beta, M)
    out2 = _bn_apply2d(y2, scale, shift, relu=True)
    return out2.reshape(N, H, W, Cout)


# ----------------------------------------------------------------------------
# Model definition (parameters + forward)
# ----------------------------------------------------------------------------
def _kaiming_conv(key, cout, cin_g, kh, kw):
    fan_out = cout * kh * kw
    std = (2.0 / fan_out) ** 0.5
    return std * jax.random.normal(key, (cout, cin_g, kh, kw), jnp.float32)


def init_params(key, num_classes, layers, groups, base_width):
    expansion = 4
    kit = iter(jax.random.split(key, 256))
    nk = lambda: next(kit)
    p = {}
    inplanes = 64
    p['stem_w'] = _kaiming_conv(nk(), 64, 3, 3, 3)
    p['stem_g'] = jnp.ones((64,), jnp.float32)
    p['stem_b'] = jnp.zeros((64,), jnp.float32)

    all_layers = []
    for li, (planes, nblocks) in enumerate(zip([64, 128, 256, 512], layers)):
        layer_stride = 1 if li == 0 else 2
        layer_blocks = []
        for bi in range(nblocks):
            s = layer_stride if bi == 0 else 1
            width = int(planes * (base_width / 64.0)) * groups
            outp = planes * expansion
            bp = {
                'stride': s, 'groups': groups,
                'conv1_w': _kaiming_conv(nk(), width, inplanes, 1, 1),
                'bn1_g': jnp.ones((width,)), 'bn1_b': jnp.zeros((width,)),
                'conv2_w': _kaiming_conv(nk(), width, width // groups, 3, 3),
                'bn2_g': jnp.ones((width,)), 'bn2_b': jnp.zeros((width,)),
                'conv3_w': _kaiming_conv(nk(), outp, width, 1, 1),
                'bn3_g': jnp.ones((outp,)), 'bn3_b': jnp.zeros((outp,)),
            }
            if bi == 0 and (s != 1 or inplanes != outp):
                bp['down_w'] = _kaiming_conv(nk(), outp, inplanes, 1, 1)
                bp['down_g'] = jnp.ones((outp,))
                bp['down_b'] = jnp.zeros((outp,))
            layer_blocks.append(bp)
            inplanes = outp
        all_layers.append(layer_blocks)
    p['layers'] = all_layers

    fan_in = 512 * expansion
    bound = 1.0 / (fan_in ** 0.5)
    p['fc_w'] = jax.random.uniform(nk(), (num_classes, fan_in), jnp.float32,
                                   -bound, bound)
    p['fc_b'] = jax.random.uniform(nk(), (num_classes,), jnp.float32,
                                   -bound, bound)
    return p


def bottleneck_fwd(x, bp):
    s, g = bp['stride'], bp['groups']
    out = conv1x1_bn(x, bp['conv1_w'], bp['bn1_g'], bp['bn1_b'],
                     stride=1, relu=True)
    out = conv3x3_bn(out, bp['conv2_w'], bp['bn2_g'], bp['bn2_b'],
                     stride=s, groups=g, relu=True)
    if 'down_w' in bp:
        identity = conv1x1_bn(x, bp['down_w'], bp['down_g'], bp['down_b'],
                              stride=s, relu=False)
    else:
        identity = x
    # conv3 + bn3 + residual add + ReLU fused into the BN-apply kernel.
    out = conv1x1_bn(out, bp['conv3_w'], bp['bn3_g'], bp['bn3_b'],
                     stride=1, relu=True, residual=identity)
    return out


def resnext_forward(params, x_nchw):
    x = jnp.transpose(x_nchw, (0, 2, 3, 1)).astype(ACT_DTYPE)   # NCHW -> NHWC
    x = stem_conv_bn(x, params['stem_w'], params['stem_g'], params['stem_b'])
    x = maxpool3x3_s2_p1(x)
    for layer in params['layers']:
        for bp in layer:
            x = bottleneck_fwd(x, bp)
    return head(x, params['fc_w'], params['fc_b'])


# ----------------------------------------------------------------------------
if __name__ == "__main__":
    key = jax.random.PRNGKey(0)
    kp, kx = jax.random.split(key)

    # Small ResNeXt: layers=[1,1,1,1], groups=2, width_per_group=4, 10 classes.
    params = init_params(kp, num_classes=10, layers=[1, 1, 1, 1],
                         groups=2, base_width=4)

    x = jax.random.normal(kx, (2, 3, 16, 16), jnp.float32)   # NCHW, as PyTorch
    logits = resnext_forward(params, x)
    logits = jax.block_until_ready(logits)

    assert logits.shape == (2, 10), logits.shape
    assert bool(jnp.all(jnp.isfinite(logits)))
    print("KERNEL_OK")
</pallas_src>

<mosaic_0001>
module attributes {stable_mosaic.version = 11 : i64} {
  func.func @_matmul_stats_kernel(%arg0: i32, %arg1: i32, %arg2: memref<512x27xbf16, #tpu.memory_space<vmem>>, %arg3: memref<27x64xbf16, #tpu.memory_space<vmem>>, %arg4: memref<512x64xbf16, #tpu.memory_space<vmem>>, %arg5: memref<1x1x64xf32, #tpu.memory_space<vmem>>, %arg6: memref<1x1x64xf32, #tpu.memory_space<vmem>>) attributes {dimension_semantics = [#tpu.dimension_semantics<parallel>, #tpu.dimension_semantics<parallel>], iteration_bounds = array<i64: 1, 1>, scalar_prefetch = 0 : i64, scratch_operands = 0 : i64, tpu.core_type = #tpu.core_type<tc>, window_params = [{transform_indices = @transform_0, window_bounds = array<i64: 512, 27>}, {transform_indices = @transform_1, window_bounds = array<i64: 27, 64>}, {transform_indices = @transform_2, window_bounds = array<i64: 512, 64>}, {transform_indices = @transform_3, window_bounds = array<i64: 1, 1, 64>}, {transform_indices = @transform_4, window_bounds = array<i64: 1, 1, 64>}]} {
    %c0 = arith.constant 0 : index
    %c0_0 = arith.constant 0 : index
    %0 = vector.load %arg2[%c0, %c0_0] : memref<512x27xbf16, #tpu.memory_space<vmem>>, vector<512x27xbf16>
    %c0_1 = arith.constant 0 : index
    %c0_2 = arith.constant 0 : index
    %1 = vector.load %arg3[%c0_1, %c0_2] : memref<27x64xbf16, #tpu.memory_space<vmem>>, vector<27x64xbf16>
    %cst = arith.constant dense<0.000000e+00> : vector<512x64xf32>
    %2 = tpu.matmul %0, %1, %cst {dimension_numbers = #tpu.dot_dimension_numbers<[1], [0], [0], [1], [0, 0, 1, 1], [], []>} : vector<512x27xbf16>, vector<27x64xbf16>, vector<512x64xf32> -> vector<512x64xf32>
    %3 = arith.truncf %2 : vector<512x64xf32> to vector<512x64xbf16>
    %c0_3 = arith.constant 0 : index
    %c0_4 = arith.constant 0 : index
    %4 = vector.load %arg4[%c0_3, %c0_4] : memref<512x64xbf16, #tpu.memory_space<vmem>>, vector<512x64xbf16>
    tpu.vector_store %arg4[%c0_3, %c0_4], %3 {strides = array<i32>} : memref<512x64xbf16, #tpu.memory_space<vmem>>, vector<512x64xbf16>,
    %cst_5 = arith.constant dense<0.000000e+00> : vector<64xf32>
    %5 = vector.multi_reduction <add>, %2, %cst_5 [0] : vector<512x64xf32> to vector<64xf32>
    %6 = vector.shape_cast %5 : vector<64xf32> to vector<1x64xf32>
    %c0_6 = arith.constant 0 : index
    %c0_7 = arith.constant 0 : index
    %c0_8 = arith.constant 0 : index
    %7 = vector.load %arg5[%c0_6, %c0_7, %c0_8] : memref<1x1x64xf32, #tpu.memory_space<vmem>>, vector<1x1x64xf32>
    %8 = vector.shape_cast %7 : vector<1x1x64xf32> to vector<1x64xf32>
    %9 = vector.shape_cast %6 : vector<1x64xf32> to vector<1x1x64xf32>
    tpu.vector_store %arg5[%c0_6, %c0_7, %c0_8], %9 {strides = array<i32>} : memref<1x1x64xf32, #tpu.memory_space<vmem>>, vector<1x1x64xf32>,
    %10 = arith.mulf %2, %2 : vector<512x64xf32>
    %cst_9 = arith.constant dense<0.000000e+00> : vector<64xf32>
    %11 = vector.multi_reduction <add>, %10, %cst_9 [0] : vector<512x64xf32> to vector<64xf32>
    %12 = vector.shape_cast %11 : vector<64xf32> to vector<1x64xf32>
    %c0_10 = arith.constant 0 : index
    %c0_11 = arith.constant 0 : index
    %c0_12 = arith.constant 0 : index
    %13 = vector.load %arg6[%c0_10, %c0_11, %c0_12] : memref<1x1x64xf32, #tpu.memory_space<vmem>>, vector<1x1x64xf32>
    %14 = vector.shape_cast %13 : vector<1x1x64xf32> to vector<1x64xf32>
    %15 = vector.shape_cast %12 : vector<1x64xf32> to vector<1x1x64xf32>
    tpu.vector_store %arg6[%c0_10, %c0_11, %c0_12], %15 {strides = array<i32>} : memref<1x1x64xf32, #tpu.memory_space<vmem>>, vector<1x1x64xf32>,
    return
  }
  func.func @transform_0(%arg0: i32, %arg1: i32) -> (i32, i32) {
    %c0_i32 = arith.constant 0 : i32
    %c0_i32_0 = arith.constant 0 : i32
    return %arg0, %c0_i32 : i32, i32
  }
  func.func @transform_1(%arg0: i32, %arg1: i32) -> (i32, i32) {
    %c0_i32 = arith.constant 0 : i32
    %c0_i32_0 = arith.constant 0 : i32
    return %c0_i32, %arg1 : i32, i32
  }
  func.func @transform_2(%arg0: i32, %arg1: i32) -> (i32, i32) {
    %c0_i32 = arith.constant 0 : i32
    return %arg0, %arg1 : i32, i32
  }
  func.func @transform_3(%arg0: i32, %arg1: i32) -> (i32, i32, i32) {
    %c0_i32 = arith.constant 0 : i32
    %c0_i32_0 = arith.constant 0 : i32
    return %arg0, %c0_i32, %arg1 : i32, i32, i32
  }
  func.func @transform_4(%arg0: i32, %arg1: i32) -> (i32, i32, i32) {
    %c0_i32 = arith.constant 0 : i32
    %c0_i32_0 = arith.constant 0 : i32
    return %arg0, %c0_i32, %arg1 : i32, i32, i32
  }
}

</mosaic_0001>

<llo_original>
// kernel: tpu_custom_call.1
$region0: #{tpu_custom_call.1}
  #allocation0 [shape = 'u32[]', space=smem, size = 0x4, offset = 0x4, fixed_abs, tag = 'smem constant byte address 0x4 - core index']
  #allocation1 [shape = 'u32[144,128]{1,0:T(1,128)}', space=vmem, size = 0x12000, scoped, tag = 'internal scratch']
  %s0 = inlined_call_operand.vmem [shape: bf16[512,27], index: 0, kind: input, shape index: {}]
  %s1 = inlined_call_operand.vmem [shape: bf16[27,64], index: 1, kind: input, shape index: {}]
  %s2 = inlined_call_operand.vmem [shape: bf16[512,64], index: 2, kind: output, shape index: {0}]
  %s3 = inlined_call_operand.hbm [shape: f32[1,1,64], index: 3, kind: output, shape index: {1}]
  %s4 = inlined_call_operand.hbm [shape: f32[1,1,64], index: 4, kind: output, shape index: {2}]
  %5 = xla_tuple %s2, %s3, %s4
  %s6 = sld [smem:[#allocation0]]
  $region34: #{tpu_custom_call.1} parent=0
    _
  %s8 = ssub.s32 1, %s6
  %s9 = scalar_select 0, %s8, %s6
  $region1: #{tpu_custom_call.1} parent=0
    #allocation2 [shape = 'u8[512]{0}', space=vmem, size = 0x400, scoped, tag = 'output window, operand 1, single buffered']
    #allocation3 [shape = 's32[1]{0}', space=sflag, size = 0x4, scoped, tag = 'scoped memory for tpu_custom_call.1']
    #allocation4 [shape = 'u8[512]{0}', space=vmem, size = 0x400, scoped, tag = 'output window, operand 2, single buffered']
    #allocation5 [shape = 's32[1]{0}', space=sflag, size = 0x4, scoped, tag = 'scoped memory for tpu_custom_call.1']
    %10 = vsyncpa [#allocation3], 0
    %11 = vsyncpa [#allocation5], 0
    // Predicated region
    $region2: #{tpu_custom_call.1} parent=1 // pred_check
      _
    $region3: #{tpu_custom_call.1} parent=1 // pred_check_branch
      %13 = sbr.rel (0) target = $region5
    $region4: #{tpu_custom_call.1} parent=1 // pred_region
      _
    $region5: #{tpu_custom_call.1} parent=1 // pred_fallthru
      _
    // Predicated region
    $region6: #{tpu_custom_call.1} parent=1 // pred_check
      _
    $region7: #{tpu_custom_call.1} parent=1 // pred_check_branch
      %15 = sbr.rel (0) target = $region9
    $region8: #{tpu_custom_call.1} parent=1 // pred_region
      _
    $region9: #{tpu_custom_call.1} parent=1 // pred_fallthru
      _
    %v17 = vld [vmem:[%s0] sm:$0xf]
    %v18 = vld [vmem:[%s0 + $0x4] sm:$0xf]
    %v19 = vld [vmem:[%s0 + $0x8] sm:$0xf]
    %v20 = vld [vmem:[%s0 + $0xc] sm:$0xf]
    %v21 = vld [vmem:[%s0 + $0x10] sm:$0xf]
    %v22 = vld [vmem:[%s0 + $0x14] sm:$0xf]
    %v23 = vld [vmem:[%s0 + $0x18] sm:$0xf]
    %v24 = vld [vmem:[%s0 + $0x1c] sm:$0xf]
    %v25 = vld [vmem:[%s0 + $0x20] sm:$0xf]
    %v26 = vld [vmem:[%s0 + $0x24] sm:$0xf]
    %v27 = vld [vmem:[%s0 + $0x28] sm:$0xf]
    %v28 = vld [vmem:[%s0 + $0x2c] sm:$0xf]
    %v29 = vld [vmem:[%s0 + $0x30] sm:$0xf]
    %v30 = vld [vmem:[%s0 + $0x34] sm:$0xf]
    %v31 = vld [vmem:[%s0 + $0x38] sm:$0xf]
    %v32 = vld [vmem:[%s0 + $0x3c] sm:$0xf]
    %v33 = vld [vmem:[%s0 + $0x40] sm:$0xf]
    %v34 = vld [vmem:[%s0 + $0x44] sm:$0xf]
    %v35 = vld [vmem:[%s0 + $0x48] sm:$0xf]
    %v36 = vld [vmem:[%s0 + $0x4c] sm:$0xf]
    %v37 = vld [vmem:[%s0 + $0x50] sm:$0xf]
    %v38 = vld [vmem:[%s0 + $0x54] sm:$0xf]
    %v39 = vld [vmem:[%s0 + $0x58] sm:$0xf]
    %v40 = vld [vmem:[%s0 + $0x5c] sm:$0xf]
    %v41 = vld [vmem:[%s0 + $0x60] sm:$0xf]
    %v42 = vld [vmem:[%s0 + $0x64] sm:$0xf]
    %v43 = vld [vmem:[%s0 + $0x68] sm:$0xf]
    %v44 = vld [vmem:[%s0 + $0x6c] sm:$0xf]
    %v45 = vld [vmem:[%s0 + $0x70] sm:$0xf]
    %v46 = vld [vmem:[%s0 + $0x74] sm:$0xf]
    %v47 = vld [vmem:[%s0 + $0x78] sm:$0xf]
    %v48 = vld [vmem:[%s0 + $0x7c] sm:$0xf]
    %v49 = vld [vmem:[%s0 + $0x80] sm:$0xf]
    %v50 = vld [vmem:[%s0 + $0x84] sm:$0xf]
    %v51 = vld [vmem:[%s0 + $0x88] sm:$0xf]
    %v52 = vld [vmem:[%s0 + $0x8c] sm:$0xf]
    %v53 = vld [vmem:[%s0 + $0x90] sm:$0xf]
    %v54 = vld [vmem:[%s0 + $0x94] sm:$0xf]
    %v55 = vld [vmem:[%s0 + $0x98] sm:$0xf]
    %v56 = vld [vmem:[%s0 + $0x9c] sm:$0xf]
    %v57 = vld [vmem:[%s0 + $0xa0] sm:$0xf]
    %v58 = vld [vmem:[%s0 + $0xa4] sm:$0xf]
    %v59 = vld [vmem:[%s0 + $0xa8] sm:$0xf]
    %v60 = vld [vmem:[%s0 + $0xac] sm:$0xf]
    %v61 = vld [vmem:[%s0 + $0xb0] sm:$0xf]
    %v62 = vld [vmem:[%s0 + $0xb4] sm:$0xf]
    %v63 = vld [vmem:[%s0 + $0xb8] sm:$0xf]
    %v64 = vld [vmem:[%s0 + $0xbc] sm:$0xf]
    %v65 = vld [vmem:[%s0 + $0xc0] sm:$0xf]
    %v66 = vld [vmem:[%s0 + $0xc4] sm:$0xf]
    %v67 = vld [vmem:[%s0 + $0xc8] sm:$0xf]
    %v68 = vld [vmem:[%s0 + $0xcc] sm:$0xf]
    %v69 = vld [vmem:[%s0 + $0xd0] sm:$0xf]
    %v70 = vld [vmem:[%s0 + $0xd4] sm:$0xf]
    %v71 = vld [vmem:[%s0 + $0xd8] sm:$0xf]
    %v72 = vld [vmem:[%s0 + $0xdc] sm:$0xf]
    %v73 = vld [vmem:[%s0 + $0xe0] sm:$0xf]
    %v74 = vld [vmem:[%s0 + $0xe4] sm:$0xf]
    %v75 = vld [vmem:[%s0 + $0xe8] sm:$0xf]
    %v76 = vld [vmem:[%s0 + $0xec] sm:$0xf]
    %v77 = vld [vmem:[%s0 + $0xf0] sm:$0xf]
    %v78 = vld [vmem:[%s0 + $0xf4] sm:$0xf]
    %v79 = vld [vmem:[%s0 + $0xf8] sm:$0xf]
    %v80 = vld [vmem:[%s0 + $0xfc] sm:$0xf]
    %v81 = vld [vmem:[%s1] sm:$0xf]
    %v82 = vld [vmem:[%s1 + $0x4] sm:$0xf]
    %v83 = vld [vmem:[%s1 + $0x8] sm:$0xf]
    %v84 = vld [vmem:[%s1 + $0xc] sm:$0x3]
    %v149 = vunpack.c.l.b16 %v17
    %v150 = vunpack.c.l.b16 %v18
    %v151 = vunpack.c.l.b16 %v19
    %v152 = vunpack.c.l.b16 %v20
    %v153 = vunpack.c.l.b16 %v21
    %v154 = vunpack.c.l.b16 %v22
    %v155 = vunpack.c.l.b16 %v23
    %v156 = vunpack.c.l.b16 %v24
    %v157 = vunpack.c.l.b16 %v25
    %v158 = vunpack.c.l.b16 %v26
    %v159 = vunpack.c.l.b16 %v27
    %v160 = vunpack.c.l.b16 %v28
    %v161 = vunpack.c.l.b16 %v29
    %v162 = vunpack.c.l.b16 %v30
    %v163 = vunpack.c.l.b16 %v31
    %v164 = vunpack.c.l.b16 %v32
    %v165 = vunpack.c.l.b16 %v33
    %v166 = vunpack.c.l.b16 %v34
    %v167 = vunpack.c.l.b16 %v35
    %v168 = vunpack.c.l.b16 %v36
    %v169 = vunpack.c.l.b16 %v37
    %v170 = vunpack.c.l.b16 %v38
    %v171 = vunpack.c.l.b16 %v39
    %v172 = vunpack.c.l.b16 %v40
    %v173 = vunpack.c.l.b16 %v41
    %v174 = vunpack.c.l.b16 %v42
    %v175 = vunpack.c.l.b16 %v43
    %v176 = vunpack.c.l.b16 %v44
    %v177 = vunpack.c.l.b16 %v45
    %v178 = vunpack.c.l.b16 %v46
    %v179 = vunpack.c.l.b16 %v47
    %v180 = vunpack.c.l.b16 %v48
    %v181 = vunpack.c.l.b16 %v49
    %v182 = vunpack.c.l.b16 %v50
    %v183 = vunpack.c.l.b16 %v51
    %v184 = vunpack.c.l.b16 %v52
    %v185 = vunpack.c.l.b16 %v53
    %v186 = vunpack.c.l.b16 %v54
    %v187 = vunpack.c.l.b16 %v55
    %v188 = vunpack.c.l.b16 %v56
    %v189 = vunpack.c.l.b16 %v57
    %v190 = vunpack.c.l.b16 %v58
    %v191 = vunpack.c.l.b16 %v59
    %v192 = vunpack.c.l.b16 %v60
    %v193 = vunpack.c.l.b16 %v61
    %v194 = vunpack.c.l.b16 %v62
    %v195 = vunpack.c.l.b16 %v63
    %v196 = vunpack.c.l.b16 %v64
    %v197 = vunpack.c.l.b16 %v65
    %v198 = vunpack.c.l.b16 %v66
    %v199 = vunpack.c.l.b16 %v67
    %v200 = vunpack.c.l.b16 %v68
    %v201 = vunpack.c.l.b16 %v69
    %v202 = vunpack.c.l.b16 %v70
    %v203 = vunpack.c.l.b16 %v71
    %v204 = vunpack.c.l.b16 %v72
    %v205 = vunpack.c.l.b16 %v73
    %v206 = vunpack.c.l.b16 %v74
    %v207 = vunpack.c.l.b16 %v75
    %v208 = vunpack.c.l.b16 %v76
    %v209 = vunpack.c.l.b16 %v77
    %v210 = vunpack.c.l.b16 %v78
    %v211 = vunpack.c.l.b16 %v79
    %v212 = vunpack.c.l.b16 %v80
    %v213 = vpack.c.b16 %v150, %v149
    %v214 = vpack.c.b16 %v152, %v151
    %v215 = vpack.c.b16 %v154, %v153
    %v216 = vpack.c.b16 %v156, %v155
    %v217 = vpack.c.b16 %v158, %v157
    %v218 = vpack.c.b16 %v160, %v159
    %v219 = vpack.c.b16 %v162, %v161
    %v220 = vpack.c.b16 %v164, %v163
    %v221 = vpack.c.b16 %v166, %v165
    %v222 = vpack.c.b16 %v168, %v167
    %v223 = vpack.c.b16 %v170, %v169
    %v224 = vpack.c.b16 %v172, %v171
    %v225 = vpack.c.b16 %v174, %v173
    %v226 = vpack.c.b16 %v176, %v175
    %v227 = vpack.c.b16 %v178, %v177
    %v228 = vpack.c.b16 %v180, %v179
    %v229 = vpack.c.b16 %v182, %v181
    %v230 = vpack.c.b16 %v184, %v183
    %v231 = vpack.c.b16 %v186, %v185
    %v232 = vpack.c.b16 %v188, %v187
    %v233 = vpack.c.b16 %v190, %v189
    %v234 = vpack.c.b16 %v192, %v191
    %v235 = vpack.c.b16 %v194, %v193
    %v236 = vpack.c.b16 %v196, %v195
    %v237 = vpack.c.b16 %v198, %v197
    %v238 = vpack.c.b16 %v200, %v199
    %v239 = vpack.c.b16 %v202, %v201
    %v240 = vpack.c.b16 %v204, %v203
    %v241 = vpack.c.b16 %v206, %v205
    %v242 = vpack.c.b16 %v208, %v207
    %v243 = vpack.c.b16 %v210, %v209
    %v244 = vpack.c.b16 %v212, %v211
    %v249 = vunpack.c.l.b16 %v81
    %v250 = vunpack.c.l.b16 %v82
    %v251 = vunpack.c.l.b16 %v83
    %v252 = vunpack.c.l.b16 %v84
    %v253 = vpack.c.b16 %v250, %v249
    %v254 = vpack.c.b16 %v252, %v251
    %vm256 = vcmask 220160
    %v258 = vsel %vm256, %v213, 0
    %v261 = vsel %vm256, %v214, 0
    %v264 = vsel %vm256, %v215, 0
    %v267 = vsel %vm256, %v216, 0
    %v270 = vsel %vm256, %v217, 0
    %v273 = vsel %vm256, %v218, 0
    %v276 = vsel %vm256, %v219, 0
    %v279 = vsel %vm256, %v220, 0
    %v282 = vsel %vm256, %v221, 0
    %v285 = vsel %vm256, %v222, 0
    %v288 = vsel %vm256, %v223, 0
    %v291 = vsel %vm256, %v224, 0
    %v294 = vsel %vm256, %v225, 0
    %v297 = vsel %vm256, %v226, 0
    %v300 = vsel %vm256, %v227, 0
    %v303 = vsel %vm256, %v228, 0
    %v306 = vsel %vm256, %v229, 0
    %v309 = vsel %vm256, %v230, 0
    %v312 = vsel %vm256, %v231, 0
    %v315 = vsel %vm256, %v232, 0
    %v318 = vsel %vm256, %v233, 0
    %v321 = vsel %vm256, %v234, 0
    %v324 = vsel %vm256, %v235, 0
    %v327 = vsel %vm256, %v236, 0
    %v330 = vsel %vm256, %v237, 0
    %v333 = vsel %vm256, %v238, 0
    %v336 = vsel %vm256, %v239, 0
    %v339 = vsel %vm256, %v240, 0
    %v342 = vsel %vm256, %v241, 0
    %v345 = vsel %vm256, %v242, 0
    %v348 = vsel %vm256, %v243, 0
    %v351 = vsel %vm256, %v244, 0
    %vm353 = vcmask 1044480
    %vm354 = vcmask 1045504
    %v355 = vsel %vm353, 4294967295, 65535
    %v356 = vsel %vm354, %v355, 0
    %v358 = vand.u32 %v254, %v356
    %360 = vmatprep.subr.bf16.mxu0 0
    %361 = vmatpush1.bf16.msra.mxu0 %v253
    %362 = vmatprep.subr.bf16.mxu0 0
    %363 = vmatpush1.bf16.msra.mxu0 %v358
    %364 = vmatprep.subr.bf16.mxu0 0
    %365 = vmatpush1.bf16.msra.mxu0 0
    %366 = vmatprep.subr.bf16.mxu0 0
    %367 = vmatpush1.bf16.msra.mxu0 0
    %368 = vmatprep.subr.bf16.mxu0 0
    %369 = vmatpush1.bf16.msra.mxu0 0
    %370 = vmatprep.subr.bf16.mxu0 0
    %371 = vmatpush1.bf16.msra.mxu0 0
    %372 = vmatprep.subr.bf16.mxu0 0
    %373 = vmatpush1.bf16.msra.mxu0 0
    %374 = vmatprep.subr.bf16.mxu0 0
    %375 = vmatpush1.bf16.msra.mxu0 0
    %376 = vmatprep.subr.bf16.mxu0 0
    %377 = vmatpush1.bf16.msra.mxu0 0
    %378 = vmatprep.subr.bf16.mxu0 0
    %379 = vmatpush1.bf16.msra.mxu0 0
    %380 = vmatprep.subr.bf16.mxu0 0
    %381 = vmatpush1.bf16.msra.mxu0 0
    %382 = vmatprep.subr.bf16.mxu0 0
    %383 = vmatpush1.bf16.msra.mxu0 0
    %384 = vmatprep.subr.bf16.mxu0 0
    %385 = vmatpush1.bf16.msra.mxu0 0
    %386 = vmatprep.subr.bf16.mxu0 0
    %387 = vmatpush1.bf16.msra.mxu0 0
    %388 = vmatprep.subr.bf16.mxu0 0
    %389 = vmatpush1.bf16.msra.mxu0 0
    %390 = vmatprep.subr.bf16.mxu0 0
    %391 = vmatpush1.bf16.msra.mxu0 0
    %392 = vmatprep.mubr.bf16.mxu0 0
    %393 = vmatmul.mubr.bf16.gmra.mrb[0].mxu0 %v258
    %v394 = vpop.f32.mrb[0].mxu0
    %v395 = vadd.f32 0.0, %v394
    %v396 = vpop.f32.mrb[0].mxu0
    %v397 = vpop.f32.mrb[0].mxu0
    %v398 = vadd.f32 0.0, %v397
    %v399 = vpop.f32.mrb[0].mxu0
    %400 = vmatprep.mubr.bf16.mxu0 0
    %401 = vmatmul.mubr.bf16.gmra.mrb[0].mxu0 %v261
    %v402 = vpop.f32.mrb[0].mxu0
    %v403 = vadd.f32 0.0, %v402
    %v404 = vpop.f32.mrb[0].mxu0
    %v405 = vpop.f32.mrb[0].mxu0
    %v406 = vadd.f32 0.0, %v405
    %v407 = vpop.f32.mrb[0].mxu0
    %408 = vmatprep.mubr.bf16.mxu0 0
    %409 = vmatmul.mubr.bf16.gmra.mrb[0].mxu0 %v264
    %v410 = vpop.f32.mrb[0].mxu0
    %v411 = vadd.f32 0.0, %v410
    %v412 = vpop.f32.mrb[0].mxu0
    %v413 = vpop.f32.mrb[0].mxu0
    %v414 = vadd.f32 0.0, %v413
    %v415 = vpop.f32.mrb[0].mxu0
    %416 = vmatprep.mubr.bf16.mxu0 0
    %417 = vmatmul.mubr.bf16.gmra.mrb[0].mxu0 %v267
    %v418 = vpop.f32.mrb[0].mxu0
    %v419 = vadd.f32 0.0, %v418
    %v420 = vpop.f32.mrb[0].mxu0
    %v421 = vpop.f32.mrb[0].mxu0
    %v422 = vadd.f32 0.0, %v421
    %v423 = vpop.f32.mrb[0].mxu0
    %424 = vmatprep.mubr.bf16.mxu0 0
    %425 = vmatmul.mubr.bf16.gmra.mrb[0].mxu0 %v270
    %v426 = vpop.f32.mrb[0].mxu0
    %v427 = vadd.f32 0.0, %v426
    %v428 = vpop.f32.mrb[0].mxu0
    %v429 = vpop.f32.mrb[0].mxu0
    %v430 = vadd.f32 0.0, %v429
    %v431 = vpop.f32.mrb[0].mxu0
    %432 = vmatprep.mubr.bf16.mxu0 0
    %433 = vmatmul.mubr.bf16.gmra.mrb[0].mxu0 %v273
    %v434 = vpop.f32.mrb[0].mxu0
    %v435 = vadd.f32 0.0, %v434
    %v436 = vpop.f32.mrb[0].mxu0
    %v437 = vpop.f32.mrb[0].mxu0
    %v438 = vadd.f32 0.0, %v437
    %v439 = vpop.f32.mrb[0].mxu0
    %440 = vmatprep.mubr.bf16.mxu0 0
    %441 = vmatmul.mubr.bf16.gmra.mrb[0].mxu0 %v276
    %v442 = vpop.f32.mrb[0].mxu0
    %v443 = vadd.f32 0.0, %v442
    %v444 = vpop.f32.mrb[0].mxu0
    %v445 = vpop.f32.mrb[0].mxu0
    %v446 = vadd.f32 0.0, %v445
    %v447 = vpop.f32.mrb[0].mxu0
    %448 = vmatprep.mubr.bf16.mxu0 0
    %449 = vmatmul.mubr.bf16.gmra.mrb[0].mxu0 %v279
    %v450 = vpop.f32.mrb[0].mxu0
    %v451 = vadd.f32 0.0, %v450
    %v452 = vpop.f32.mrb[0].mxu0
    %v453 = vpop.f32.mrb[0].mxu0
    %v454 = vadd.f32 0.0, %v453
    %v455 = vpop.f32.mrb[0].mxu0
    %456 = vmatprep.mubr.bf16.mxu0 0
    %457 = vmatmul.mubr.bf16.gmra.mrb[0].mxu0 %v282
    %v458 = vpop.f32.mrb[0].mxu0
    %v459 = vadd.f32 0.0, %v458
    %v460 = vpop.f32.mrb[0].mxu0
    %v461 = vpop.f32.mrb[0].mxu0
    %v462 = vadd.f32 0.0, %v461
    %v463 = vpop.f32.mrb[0].mxu0
    %464 = vmatprep.mubr.bf16.mxu0 0
    %465 = vmatmul.mubr.bf16.gmra.mrb[0].mxu0 %v285
    %v466 = vpop.f32.mrb[0].mxu0
    %v467 = vadd.f32 0.0, %v466
    %v468 = vpop.f32.mrb[0].mxu0
    %v469 = vpop.f32.mrb[0].mxu0
    %v470 = vadd.f32 0.0, %v469
    %v471 = vpop.f32.mrb[0].mxu0
    %472 = vmatprep.mubr.bf16.mxu0 0
    %473 = vmatmul.mubr.bf16.gmra.mrb[0].mxu0 %v288
    %v474 = vpop.f32.mrb[0].mxu0
    %v475 = vadd.f32 0.0, %v474
    %v476 = vpop.f32.mrb[0].mxu0
    %v477 = vpop.f32.mrb[0].mxu0
    %v478 = vadd.f32 0.0, %v477
    %v479 = vpop.f32.mrb[0].mxu0
    %480 = vmatprep.mubr.bf16.mxu0 0
    %481 = vmatmul.mubr.bf16.gmra.mrb[0].mxu0 %v291
    %v482 = vpop.f32.mrb[0].mxu0
    %v483 = vadd.f32 0.0, %v482
    %v484 = vpop.f32.mrb[0].mxu0
    %v485 = vpop.f32.mrb[0].mxu0
    %v486 = vadd.f32 0.0, %v485
    %v487 = vpop.f32.mrb[0].mxu0
    %488 = vmatprep.mubr.bf16.mxu0 0
    %489 = vmatmul.mubr.bf16.gmra.mrb[0].mxu0 %v294
    %v490 = vpop.f32.mrb[0].mxu0
    %v491 = vadd.f32 0.0, %v490
    %v492 = vpop.f32.mrb[0].mxu0
    %v493 = vpop.f32.mrb[0].mxu0
    %v494 = vadd.f32 0.0, %v493
    %v495 = vpop.f32.mrb[0].mxu0
    %496 = vmatprep.mubr.bf16.mxu0 0
    %497 = vmatmul.mubr.bf16.gmra.mrb[0].mxu0 %v297
    %v498 = vpop.f32.mrb[0].mxu0
    %v499 = vadd.f32 0.0, %v498
    %v500 = vpop.f32.mrb[0].mxu0
    %v501 = vpop.f32.mrb[0].mxu0
    %v502 = vadd.f32 0.0, %v501
    %v503 = vpop.f32.mrb[0].mxu0
    %504 = vmatprep.mubr.bf16.mxu0 0
    %505 = vmatmul.mubr.bf16.gmra.mrb[0].mxu0 %v300
    %v506 = vpop.f32.mrb[0].mxu0
    %v507 = vadd.f32 0.0, %v506
    %v508 = vpop.f32.mrb[0].mxu0
    %v509 = vpop.f32.mrb[0].mxu0
    %v510 = vadd.f32 0.0, %v509
    %v511 = vpop.f32.mrb[0].mxu0
    %512 = vmatprep.mubr.bf16.mxu0 0
    %513 = vmatmul.mubr.bf16.gmra.mrb[0].mxu0 %v303
    %v514 = vpop.f32.mrb[0].mxu0
    %v515 = vadd.f32 0.0, %v514
    %v516 = vpop.f32.mrb[0].mxu0
    %v517 = vpop.f32.mrb[0].mxu0
    %v518 = vadd.f32 0.0, %v517
    %v519 = vpop.f32.mrb[0].mxu0
    %520 = vmatprep.mubr.bf16.mxu0 0
    %521 = vmatmul.mubr.bf16.gmra.mrb[0].mxu0 %v306
    %v522 = vpop.f32.mrb[0].mxu0
    %v523 = vadd.f32 0.0, %v522
    %v524 = vpop.f32.mrb[0].mxu0
    %v525 = vpop.f32.mrb[0].mxu0
    %v526 = vadd.f32 0.0, %v525
    %v527 = vpop.f32.mrb[0].mxu0
    %528 = vmatprep.mubr.bf16.mxu0 0
    %529 = vmatmul.mubr.bf16.gmra.mrb[0].mxu0 %v309
    %v530 = vpop.f32.mrb[0].mxu0
    %v531 = vadd.f32 0.0, %v530
    %v532 = vpop.f32.mrb[0].mxu0
    %v533 = vpop.f32.mrb[0].mxu0
    %v534 = vadd.f32 0.0, %v533
    %v535 = vpop.f32.mrb[0].mxu0
    %536 = vmatprep.mubr.bf16.mxu0 0
    %537 = vmatmul.mubr.bf16.gmra.mrb[0].mxu0 %v312
    %v538 = vpop.f32.mrb[0].mxu0
    %v539 = vadd.f32 0.0, %v538
    %v540 = vpop.f32.mrb[0].mxu0
    %v541 = vpop.f32.mrb[0].mxu0
    %v542 = vadd.f32 0.0, %v541
    %v543 = vpop.f32.mrb[0].mxu0
    %544 = vmatprep.mubr.bf16.mxu0 0
    %545 = vmatmul.mubr.bf16.gmra.mrb[0].mxu0 %v315
    %v546 = vpop.f32.mrb[0].mxu0
    %v547 = vadd.f32 0.0, %v546
    %v548 = vpop.f32.mrb[0].mxu0
    %v549 = vpop.f32.mrb[0].mxu0
    %v550 = vadd.f32 0.0, %v549
    %v551 = vpop.f32.mrb[0].mxu0
    %552 = vmatprep.mubr.bf16.mxu0 0
    %553 = vmatmul.mubr.bf16.gmra.mrb[0].mxu0 %v318
    %v554 = vpop.f32.mrb[0].mxu0
    %v555 = vadd.f32 0.0, %v554
    %v556 = vpop.f32.mrb[0].mxu0
    %v557 = vpop.f32.mrb[0].mxu0
    %v558 = vadd.f32 0.0, %v557
    %v559 = vpop.f32.mrb[0].mxu0
    %560 = vmatprep.mubr.bf16.mxu0 0
    %561 = vmatmul.mubr.bf16.gmra.mrb[0].mxu0 %v321
    %v562 = vpop.f32.mrb[0].mxu0
    %v563 = vadd.f32 0.0, %v562
    %v564 = vpop.f32.mrb[0].mxu0
    %v565 = vpop.f32.mrb[0].mxu0
    %v566 = vadd.f32 0.0, %v565
    %v567 = vpop.f32.mrb[0].mxu0
    %568 = vmatprep.mubr.bf16.mxu0 0
    %569 = vmatmul.mubr.bf16.gmra.mrb[0].mxu0 %v324
    %v570 = vpop.f32.mrb[0].mxu0
    %v571 = vadd.f32 0.0, %v570
    %v572 = vpop.f32.mrb[0].mxu0
    %v573 = vpop.f32.mrb[0].mxu0
    %v574 = vadd.f32 0.0, %v573
    %v575 = vpop.f32.mrb[0].mxu0
    %576 = vmatprep.mubr.bf16.mxu0 0
    %577 = vmatmul.mubr.bf16.gmra.mrb[0].mxu0 %v327
    %v578 = vpop.f32.mrb[0].mxu0
    %v579 = vadd.f32 0.0, %v578
    %v580 = vpop.f32.mrb[0].mxu0
    %v581 = vpop.f32.mrb[0].mxu0
    %v582 = vadd.f32 0.0, %v581
    %v583 = vpop.f32.mrb[0].mxu0
    %584 = vmatprep.mubr.bf16.mxu0 0
    %585 = vmatmul.mubr.bf16.gmra.mrb[0].mxu0 %v330
    %v586 = vpop.f32.mrb[0].mxu0
    %v587 = vadd.f32 0.0, %v586
    %v588 = vpop.f32.mrb[0].mxu0
    %v589 = vpop.f32.mrb[0].mxu0
    %v590 = vadd.f32 0.0, %v589
    %v591 = vpop.f32.mrb[0].mxu0
    %592 = vmatprep.mubr.bf16.mxu0 0
    %593 = vmatmul.mubr.bf16.gmra.mrb[0].mxu0 %v333
    %v594 = vpop.f32.mrb[0].mxu0
    %v595 = vadd.f32 0.0, %v594
    %v596 = vpop.f32.mrb[0].mxu0
    %v597 = vpop.f32.mrb[0].mxu0
    %v598 = vadd.f32 0.0, %v597
    %v599 = vpop.f32.mrb[0].mxu0
    %600 = vmatprep.mubr.bf16.mxu0 0
    %601 = vmatmul.mubr.bf16.gmra.mrb[0].mxu0 %v336
    %v602 = vpop.f32.mrb[0].mxu0
    %v603 = vadd.f32 0.0, %v602
    %v604 = vpop.f32.mrb[0].mxu0
    %v605 = vpop.f32.mrb[0].mxu0
    %v606 = vadd.f32 0.0, %v605
    %v607 = vpop.f32.mrb[0].mxu0
    %608 = vmatprep.mubr.bf16.mxu0 0
    %609 = vmatmul.mubr.bf16.gmra.mrb[0].mxu0 %v339
    %v610 = vpop.f32.mrb[0].mxu0
    %v611 = vadd.f32 0.0, %v610
    %v612 = vpop.f32.mrb[0].mxu0
    %v613 = vpop.f32.mrb[0].mxu0
    %v614 = vadd.f32 0.0, %v613
    %v615 = vpop.f32.mrb[0].mxu0
    %616 = vmatprep.mubr.bf16.mxu0 0
    %617 = vmatmul.mubr.bf16.gmra.mrb[0].mxu0 %v342
    %v618 = vpop.f32.mrb[0].mxu0
    %v619 = vadd.f32 0.0, %v618
    %v620 = vpop.f32.mrb[0].mxu0
    %v621 = vpop.f32.mrb[0].mxu0
    %v622 = vadd.f32 0.0, %v621
    %v623 = vpop.f32.mrb[0].mxu0
    %624 = vmatprep.mubr.bf16.mxu0 0
    %625 = vmatmul.mubr.bf16.gmra.mrb[0].mxu0 %v345
    %v626 = vpop.f32.mrb[0].mxu0
    %v627 = vadd.f32 0.0, %v626
    %v628 = vpop.f32.mrb[0].mxu0
    %v629 = vpop.f32.mrb[0].mxu0
    %v630 = vadd.f32 0.0, %v629
    %v631 = vpop.f32.mrb[0].mxu0
    %632 = vmatprep.mubr.bf16.mxu0 0
    %633 = vmatmul.mubr.bf16.gmra.mrb[0].mxu0 %v348
    %v634 = vpop.f32.mrb[0].mxu0
    %v635 = vadd.f32 0.0, %v634
    %v636 = vpop.f32.mrb[0].mxu0
    %v637 = vpop.f32.mrb[0].mxu0
    %v638 = vadd.f32 0.0, %v637
    %v639 = vpop.f32.mrb[0].mxu0
    %640 = vmatprep.mubr.bf16.mxu0 0
    %641 = vmatmul.mubr.bf16.gmra.mrb[0].mxu0 %v351
    %v642 = vpop.f32.mrb[0].mxu0
    %v643 = vadd.f32 0.0, %v642
    %v644 = vpop.f32.mrb[0].mxu0
    %v645 = vpop.f32.mrb[0].mxu0
    %v646 = vadd.f32 0.0, %v645
    %v647 = vpop.f32.mrb[0].mxu0
    %648 = vdwg.mxu0
    %v649 = vpack.c.bf16 %v398, %v395
    %v650 = vpack.c.bf16 %v406, %v403
    %v651 = vpack.c.bf16 %v414, %v411
    %v652 = vpack.c.bf16 %v422, %v419
    %v653 = vpack.c.bf16 %v430, %v427
    %v654 = vpack.c.bf16 %v438, %v435
    %v655 = vpack.c.bf16 %v446, %v443
    %v656 = vpack.c.bf16 %v454, %v451
    %v657 = vpack.c.bf16 %v462, %v459
    %v658 = vpack.c.bf16 %v470, %v467
    %v659 = vpack.c.bf16 %v478, %v475
    %v660 = vpack.c.bf16 %v486, %v483
    %v661 = vpack.c.bf16 %v494, %v491
    %v662 = vpack.c.bf16 %v502, %v499
    %v663 = vpack.c.bf16 %v510, %v507
    %v664 = vpack.c.bf16 %v518, %v515
    %v665 = vpack.c.bf16 %v526, %v523
    %v666 = vpack.c.bf16 %v534, %v531
    %v667 = vpack.c.bf16 %v542, %v539
    %v668 = vpack.c.bf16 %v550, %v547
    %v669 = vpack.c.bf16 %v558, %v555
    %v670 = vpack.c.bf16 %v566, %v563
    %v671 = vpack.c.bf16 %v574, %v571
    %v672 = vpack.c.bf16 %v582, %v579
    %v673 = vpack.c.bf16 %v590, %v587
    %v674 = vpack.c.bf16 %v598, %v595
    %v675 = vpack.c.bf16 %v606, %v603
    %v676 = vpack.c.bf16 %v614, %v611
    %v677 = vpack.c.bf16 %v622, %v619
    %v678 = vpack.c.bf16 %v630, %v627
    %v679 = vpack.c.bf16 %v638, %v635
    %v680 = vpack.c.bf16 %v646, %v643
    %v713 = vunpack.c.l.b16 %v649
    %v714 = vunpack.c.h.b16 %v649
    %v715 = vunpack.c.l.b16 %v650
    %v716 = vunpack.c.h.b16 %v650
    %v717 = vunpack.c.l.b16 %v651
    %v718 = vunpack.c.h.b16 %v651
    %v719 = vunpack.c.l.b16 %v652
    %v720 = vunpack.c.h.b16 %v652
    %v721 = vunpack.c.l.b16 %v653
    %v722 = vunpack.c.h.b16 %v653
    %v723 = vunpack.c.l.b16 %v654
    %v724 = vunpack.c.h.b16 %v654
    %v725 = vunpack.c.l.b16 %v655
    %v726 = vunpack.c.h.b16 %v655
    %v727 = vunpack.c.l.b16 %v656
    %v728 = vunpack.c.h.b16 %v656
    %v729 = vunpack.c.l.b16 %v657
    %v730 = vunpack.c.h.b16 %v657
    %v731 = vunpack.c.l.b16 %v658
    %v732 = vunpack.c.h.b16 %v658
    %v733 = vunpack.c.l.b16 %v659
    %v734 = vunpack.c.h.b16 %v659
    %v735 = vunpack.c.l.b16 %v660
    %v736 = vunpack.c.h.b16 %v660
    %v737 = vunpack.c.l.b16 %v661
    %v738 = vunpack.c.h.b16 %v661
    %v739 = vunpack.c.l.b16 %v662
    %v740 = vunpack.c.h.b16 %v662
    %v741 = vunpack.c.l.b16 %v663
    %v742 = vunpack.c.h.b16 %v663
    %v743 = vunpack.c.l.b16 %v664
    %v744 = vunpack.c.h.b16 %v664
    %v745 = vunpack.c.l.b16 %v665
    %v746 = vunpack.c.h.b16 %v665
    %v747 = vunpack.c.l.b16 %v666
    %v748 = vunpack.c.h.b16 %v666
    %v749 = vunpack.c.l.b16 %v667
    %v750 = vunpack.c.h.b16 %v667
    %v751 = vunpack.c.l.b16 %v668
    %v752 = vunpack.c.h.b16 %v668
    %v753 = vunpack.c.l.b16 %v669
    %v754 = vunpack.c.h.b16 %v669
    %v755 = vunpack.c.l.b16 %v670
    %v756 = vunpack.c.h.b16 %v670
    %v757 = vunpack.c.l.b16 %v671
    %v758 = vunpack.c.h.b16 %v671
    %v759 = vunpack.c.l.b16 %v672
    %v760 = vunpack.c.h.b16 %v672
    %v761 = vunpack.c.l.b16 %v673
    %v762 = vunpack.c.h.b16 %v673
    %v763 = vunpack.c.l.b16 %v674
    %v764 = vunpack.c.h.b16 %v674
    %v765 = vunpack.c.l.b16 %v675
    %v766 = vunpack.c.h.b16 %v675
    %v767 = vunpack.c.l.b16 %v676
    %v768 = vunpack.c.h.b16 %v676
    %v769 = vunpack.c.l.b16 %v677
    %v770 = vunpack.c.h.b16 %v677
    %v771 = vunpack.c.l.b16 %v678
    %v772 = vunpack.c.h.b16 %v678
    %v773 = vunpack.c.l.b16 %v679
    %v774 = vunpack.c.h.b16 %v679
    %v775 = vunpack.c.l.b16 %v680
    %v776 = vunpack.c.h.b16 %v680
    %v777 = vpack.c.b16 %v713, %v713
    %v778 = vpack.c.b16 %v714, %v714
    %v779 = vpack.c.b16 %v715, %v715
    %v780 = vpack.c.b16 %v716, %v716
    %v781 = vpack.c.b16 %v717, %v717
    %v782 = vpack.c.b16 %v718, %v718
    %v783 = vpack.c.b16 %v719, %v719
    %v784 = vpack.c.b16 %v720, %v720
    %v785 = vpack.c.b16 %v721, %v721
    %v786 = vpack.c.b16 %v722, %v722
    %v787 = vpack.c.b16 %v723, %v723
    %v788 = vpack.c.b16 %v724, %v724
    %v789 = vpack.c.b16 %v725, %v725
    %v790 = vpack.c.b16 %v726, %v726
    %v791 = vpack.c.b16 %v727, %v727
    %v792 = vpack.c.b16 %v728, %v728
    %v793 = vpack.c.b16 %v729, %v729
    %v794 = vpack.c.b16 %v730, %v730
    %v795 = vpack.c.b16 %v731, %v731
    %v796 = vpack.c.b16 %v732, %v732
    %v797 = vpack.c.b16 %v733, %v733
    %v798 = vpack.c.b16 %v734, %v734
    %v799 = vpack.c.b16 %v735, %v735
    %v800 = vpack.c.b16 %v736, %v736
    %v801 = vpack.c.b16 %v737, %v737
    %v802 = vpack.c.b16 %v738, %v738
    %v803 = vpack.c.b16 %v739, %v739
    %v804 = vpack.c.b16 %v740, %v740
    %v805 = vpack.c.b16 %v741, %v741
    %v806 = vpack.c.b16 %v742, %v742
    %v807 = vpack.c.b16 %v743, %v743
    %v808 = vpack.c.b16 %v744, %v744
    %v809 = vpack.c.b16 %v745, %v745
    %v810 = vpack.c.b16 %v746, %v746
    %v811 = vpack.c.b16 %v747, %v747
    %v812 = vpack.c.b16 %v748, %v748
    %v813 = vpack.c.b16 %v749, %v749
    %v814 = vpack.c.b16 %v750, %v750
    %v815 = vpack.c.b16 %v751, %v751
    %v816 = vpack.c.b16 %v752, %v752
    %v817 = vpack.c.b16 %v753, %v753
    %v818 = vpack.c.b16 %v754, %v754
    %v819 = vpack.c.b16 %v755, %v755
    %v820 = vpack.c.b16 %v756, %v756
    %v821 = vpack.c.b16 %v757, %v757
    %v822 = vpack.c.b16 %v758, %v758
    %v823 = vpack.c.b16 %v759, %v759
    %v824 = vpack.c.b16 %v760, %v760
    %v825 = vpack.c.b16 %v761, %v761
    %v826 = vpack.c.b16 %v762, %v762
    %v827 = vpack.c.b16 %v763, %v763
    %v828 = vpack.c.b16 %v764, %v764
    %v829 = vpack.c.b16 %v765, %v765
    %v830 = vpack.c.b16 %v766, %v766
    %v831 = vpack.c.b16 %v767, %v767
    %v832 = vpack.c.b16 %v768, %v768
    %v833 = vpack.c.b16 %v769, %v769
    %v834 = vpack.c.b16 %v770, %v770
    %v835 = vpack.c.b16 %v771, %v771
    %v836 = vpack.c.b16 %v772, %v772
    %v837 = vpack.c.b16 %v773, %v773
    %v838 = vpack.c.b16 %v774, %v774
    %v839 = vpack.c.b16 %v775, %v775
    %v840 = vpack.c.b16 %v776, %v776
    %vm905 = vcmask 519168
    %906 = vst.msk [vmem:[%s2] sm:$0xf] %vm905, %v777
    %907 = vst.msk [vmem:[%s2 + $0x4] sm:$0xf] %vm905, %v778
    %908 = vst.msk [vmem:[%s2 + $0x8] sm:$0xf] %vm905, %v779
    %909 = vst.msk [vmem:[%s2 + $0xc] sm:$0xf] %vm905, %v780
    %910 = vst.msk [vmem:[%s2 + $0x10] sm:$0xf] %vm905, %v781
    %911 = vst.msk [vmem:[%s2 + $0x14] sm:$0xf] %vm905, %v782
    %912 = vst.msk [vmem:[%s2 + $0x18] sm:$0xf] %vm905, %v783
    %913 = vst.msk [vmem:[%s2 + $0x1c] sm:$0xf] %vm905, %v784
    %914 = vst.msk [vmem:[%s2 + $0x20] sm:$0xf] %vm905, %v785
    %915 = vst.msk [vmem:[%s2 + $0x24] sm:$0xf] %vm905, %v786
    %916 = vst.msk [vmem:[%s2 + $0x28] sm:$0xf] %vm905, %v787
    %917 = vst.msk [vmem:[%s2 + $0x2c] sm:$0xf] %vm905, %v788
    %918 = vst.msk [vmem:[%s2 + $0x30] sm:$0xf] %vm905, %v789
    %919 = vst.msk [vmem:[%s2 + $0x34] sm:$0xf] %vm905, %v790
    %920 = vst.msk [vmem:[%s2 + $0x38] sm:$0xf] %vm905, %v791
    %921 = vst.msk [vmem:[%s2 + $0x3c] sm:$0xf] %vm905, %v792
    %922 = vst.msk [vmem:[%s2 + $0x40] sm:$0xf] %vm905, %v793
    %923 = vst.msk [vmem:[%s2 + $0x44] sm:$0xf] %vm905, %v794
    %924 = vst.msk [vmem:[%s2 + $0x48] sm:$0xf] %vm905, %v795
    %925 = vst.msk [vmem:[%s2 + $0x4c] sm:$0xf] %vm905, %v796
    %926 = vst.msk [vmem:[%s2 + $0x50] sm:$0xf] %vm905, %v797
    %927 = vst.msk [vmem:[%s2 + $0x54] sm:$0xf] %vm905, %v798
    %928 = vst.msk [vmem:[%s2 + $0x58] sm:$0xf] %vm905, %v799
    %929 = vst.msk [vmem:[%s2 + $0x5c] sm:$0xf] %vm905, %v800
    %930 = vst.msk [vmem:[%s2 + $0x60] sm:$0xf] %vm905, %v801
    %931 = vst.msk [vmem:[%s2 + $0x64] sm:$0xf] %vm905, %v802
    %932 = vst.msk [vmem:[%s2 + $0x68] sm:$0xf] %vm905, %v803
    %933 = vst.msk [vmem:[%s2 + $0x6c] sm:$0xf] %vm905, %v804
    %934 = vst.msk [vmem:[%s2 + $0x70] sm:$0xf] %vm905, %v805
    %935 = vst.msk [vmem:[%s2 + $0x74] sm:$0xf] %vm905, %v806
    %936 = vst.msk [vmem:[%s2 + $0x78] sm:$0xf] %vm905, %v807
    %937 = vst.msk [vmem:[%s2 + $0x7c] sm:$0xf] %vm905, %v808
    %938 = vst.msk [vmem:[%s2 + $0x80] sm:$0xf] %vm905, %v809
    %939 = vst.msk [vmem:[%s2 + $0x84] sm:$0xf] %vm905, %v810
    %940 = vst.msk [vmem:[%s2 + $0x88] sm:$0xf] %vm905, %v811
    %941 = vst.msk [vmem:[%s2 + $0x8c] sm:$0xf] %vm905, %v812
    %942 = vst.msk [vmem:[%s2 + $0x90] sm:$0xf] %vm905, %v813
    %943 = vst.msk [vmem:[%s2 + $0x94] sm:$0xf] %vm905, %v814
    %944 = vst.msk [vmem:[%s2 + $0x98] sm:$0xf] %vm905, %v815
    %945 = vst.msk [vmem:[%s2 + $0x9c] sm:$0xf] %vm905, %v816
    %946 = vst.msk [vmem:[%s2 + $0xa0] sm:$0xf] %vm905, %v817
    %947 = vst.msk [vmem:[%s2 + $0xa4] sm:$0xf] %vm905, %v818
    %948 = vst.msk [vmem:[%s2 + $0xa8] sm:$0xf] %vm905, %v819
    %949 = vst.msk [vmem:[%s2 + $0xac] sm:$0xf] %vm905, %v820
    %950 = vst.msk [vmem:[%s2 + $0xb0] sm:$0xf] %vm905, %v821
    %951 = vst.msk [vmem:[%s2 + $0xb4] sm:$0xf] %vm905, %v822
    %952 = vst.msk [vmem:[%s2 + $0xb8] sm:$0xf] %vm905, %v823
    %953 = vst.msk [vmem:[%s2 + $0xbc] sm:$0xf] %vm905, %v824
    %954 = vst.msk [vmem:[%s2 + $0xc0] sm:$0xf] %vm905, %v825
    %955 = vst.msk [vmem:[%s2 + $0xc4] sm:$0xf] %vm905, %v826
    %956 = vst.msk [vmem:[%s2 + $0xc8] sm:$0xf] %vm905, %v827
    %957 = vst.msk [vmem:[%s2 + $0xcc] sm:$0xf] %vm905, %v828
    %958 = vst.msk [vmem:[%s2 + $0xd0] sm:$0xf] %vm905, %v829
    %959 = vst.msk [vmem:[%s2 + $0xd4] sm:$0xf] %vm905, %v830
    %960 = vst.msk [vmem:[%s2 + $0xd8] sm:$0xf] %vm905, %v831
    %961 = vst.msk [vmem:[%s2 + $0xdc] sm:$0xf] %vm905, %v832
    %962 = vst.msk [vmem:[%s2 + $0xe0] sm:$0xf] %vm905, %v833
    %963 = vst.msk [vmem:[%s2 + $0xe4] sm:$0xf] %vm905, %v834
    %964 = vst.msk [vmem:[%s2 + $0xe8] sm:$0xf] %vm905, %v835
    %965 = vst.msk [vmem:[%s2 + $0xec] sm:$0xf] %vm905, %v836
    %966 = vst.msk [vmem:[%s2 + $0xf0] sm:$0xf] %vm905, %v837
    %967 = vst.msk [vmem:[%s2 + $0xf4] sm:$0xf] %vm905, %v838
    %968 = vst.msk [vmem:[%s2 + $0xf8] sm:$0xf] %vm905, %v839
    %969 = vst.msk [vmem:[%s2 + $0xfc] sm:$0xf] %vm905, %v840
    %vm970 = vcmask 523264
    %v971 = vsel %vm970, %v395, 0.0
    %v972 = vsel %vm970, %v398, 0.0
    %v973 = vadd.f32 %v971, %v972
    %v974 = vsel %vm970, %v403, 0.0
    %v975 = vadd.f32 %v973, %v974
    %v976 = vsel %vm970, %v406, 0.0
    %v977 = vadd.f32 %v975, %v976
    %v978 = vsel %vm970, %v411, 0.0
    %v979 = vadd.f32 %v977, %v978
    %v980 = vsel %vm970, %v414, 0.0
    %v981 = vadd.f32 %v979, %v980
    %v982 = vsel %vm970, %v419, 0.0
    %v983 = vadd.f32 %v981, %v982
    %v984 = vsel %vm970, %v422, 0.0
    %v985 = vadd.f32 %v983, %v984
    %v986 = vsel %vm970, %v427, 0.0
    %v987 = vadd.f32 %v985, %v986
    %v988 = vsel %vm970, %v430, 0.0
    %v989 = vadd.f32 %v987, %v988
    %v990 = vsel %vm970, %v435, 0.0
    %v991 = vadd.f32 %v989, %v990
    %v992 = vsel %vm970, %v438, 0.0
    %v993 = vadd.f32 %v991, %v992
    %v994 = vsel %vm970, %v443, 0.0
    %v995 = vadd.f32 %v993, %v994
    %v996 = vsel %vm970, %v446, 0.0
    %v997 = vadd.f32 %v995, %v996
    %v998 = vsel %vm970, %v451, 0.0
    %v999 = vadd.f32 %v997, %v998
    %v1000 = vsel %vm970, %v454, 0.0
    %v1001 = vadd.f32 %v999, %v1000
    %v1002 = vsel %vm970, %v459, 0.0
    %v1003 = vadd.f32 %v1001, %v1002
    %v1004 = vsel %vm970, %v462, 0.0
    %v1005 = vadd.f32 %v1003, %v1004
    %v1006 = vsel %vm970, %v467, 0.0
    %v1007 = vadd.f32 %v1005, %v1006
    %v1008 = vsel %vm970, %v470, 0.0
    %v1009 = vadd.f32 %v1007, %v1008
    %v1010 = vsel %vm970, %v475, 0.0
    %v1011 = vadd.f32 %v1009, %v1010
    %v1012 = vsel %vm970, %v478, 0.0
    %v1013 = vadd.f32 %v1011, %v1012
    %v1014 = vsel %vm970, %v483, 0.0
    %v1015 = vadd.f32 %v1013, %v1014
    %v1016 = vsel %vm970, %v486, 0.0
    %v1017 = vadd.f32 %v1015, %v1016
    %v1018 = vsel %vm970, %v491, 0.0
    %v1019 = vadd.f32 %v1017, %v1018
    %v1020 = vsel %vm970, %v494, 0.0
    %v1021 = vadd.f32 %v1019, %v1020
    %v1022 = vsel %vm970, %v499, 0.0
    %v1023 = vadd.f32 %v1021, %v1022
    %v1024 = vsel %vm970, %v502, 0.0
    %v1025 = vadd.f32 %v1023, %v1024
    %v1026 = vsel %vm970, %v507, 0.0
    %v1027 = vadd.f32 %v1025, %v1026
    %v1028 = vsel %vm970, %v510, 0.0
    %v1029 = vadd.f32 %v1027, %v1028
    %v1030 = vsel %vm970, %v515, 0.0
    %v1031 = vadd.f32 %v1029, %v1030
    %v1032 = vsel %vm970, %v518, 0.0
    %v1033 = vadd.f32 %v1031, %v1032
    %v1034 = vsel %vm970, %v523, 0.0
    %v1035 = vadd.f32 %v1033, %v1034
    %v1036 = vsel %vm970, %v526, 0.0
    %v1037 = vadd.f32 %v1035, %v1036
    %v1038 = vsel %vm970, %v531, 0.0
    %v1039 = vadd.f32 %v1037, %v1038
    %v1040 = vsel %vm970, %v534, 0.0
    %v1041 = vadd.f32 %v1039, %v1040
    %v1042 = vsel %vm970, %v539, 0.0
    %v1043 = vadd.f32 %v1041, %v1042
    %v1044 = vsel %vm970, %v542, 0.0
    %v1045 = vadd.f32 %v1043, %v1044
    %v1046 = vsel %vm970, %v547, 0.0
    %v1047 = vadd.f32 %v1045, %v1046
    %v1048 = vsel %vm970, %v550, 0.0
    %v1049 = vadd.f32 %v1047, %v1048
    %v1050 = vsel %vm970, %v555, 0.0
    %v1051 = vadd.f32 %v1049, %v1050
    %v1052 = vsel %vm970, %v558, 0.0
    %v1053 = vadd.f32 %v1051, %v1052
    %v1054 = vsel %vm970, %v563, 0.0
    %v1055 = vadd.f32 %v1053, %v1054
    %v1056 = vsel %vm970, %v566, 0.0
    %v1057 = vadd.f32 %v1055, %v1056
    %v1058 = vsel %vm970, %v571, 0.0
    %v1059 = vadd.f32 %v1057, %v1058
    %v1060 = vsel %vm970, %v574, 0.0
    %v1061 = vadd.f32 %v1059, %v1060
    %v1062 = vsel %vm970, %v579, 0.0
    %v1063 = vadd.f32 %v1061, %v1062
    %v1064 = vsel %vm970, %v582, 0.0
    %v1065 = vadd.f32 %v1063, %v1064
    %v1066 = vsel %vm970, %v587, 0.0
    %v1067 = vadd.f32 %v1065, %v1066
    %v1068 = vsel %vm970, %v590, 0.0
    %v1069 = vadd.f32 %v1067, %v1068
    %v1070 = vsel %vm970, %v595, 0.0
    %v1071 = vadd.f32 %v1069, %v1070
    %v1072 = vsel %vm970, %v598, 0.0
    %v1073 = vadd.f32 %v1071, %v1072
    %v1074 = vsel %vm970, %v603, 0.0
    %v1075 = vadd.f32 %v1073, %v1074
    %v1076 = vsel %vm970, %v606, 0.0
    %v1077 = vadd.f32 %v1075, %v1076
    %v1078 = vsel %vm970, %v611, 0.0
    %v1079 = vadd.f32 %v1077, %v1078
    %v1080 = vsel %vm970, %v614, 0.0
    %v1081 = vadd.f32 %v1079, %v1080
    %v1082 = vsel %vm970, %v619, 0.0
    %v1083 = vadd.f32 %v1081, %v1082
    %v1084 = vsel %vm970, %v622, 0.0
    %v1085 = vadd.f32 %v1083, %v1084
    %v1086 = vsel %vm970, %v627, 0.0
    %v1087 = vadd.f32 %v1085, %v1086
    %v1088 = vsel %vm970, %v630, 0.0
    %v1089 = vadd.f32 %v1087, %v1088
    %v1090 = vsel %vm970, %v635, 0.0
    %v1091 = vadd.f32 %v1089, %v1090
    %v1092 = vsel %vm970, %v638, 0.0
    %v1093 = vadd.f32 %v1091, %v1092
    %v1094 = vsel %vm970, %v643, 0.0
    %v1095 = vadd.f32 %v1093, %v1094
    %v1096 = vsel %vm970, %v646, 0.0
    %v1097 = vadd.f32 %v1095, %v1096
    %v1098 = vrot.slane %v1097, 4
    %v1099 = vadd.f32 %v1097, %v1098
    %v1100 = vrot.slane %v1099, 2
    %v1101 = vadd.f32 %v1099, %v1100
    %v1102 = vrot.slane %v1101, 1
    %v1103 = vadd.f32 %v1101, %v1102
    %vm1104 = vcmask 516096
    %1105 = vst.msk [vmem:[#allocation2] sm:$0x1] %vm1104, %v1103
    %v1106 = vmul.f32 %v395, %v395
    %v1107 = vmul.f32 %v398, %v398
    %v1108 = vmul.f32 %v403, %v403
    %v1109 = vmul.f32 %v406, %v406
    %v1110 = vmul.f32 %v411, %v411
    %v1111 = vmul.f32 %v414, %v414
    %v1112 = vmul.f32 %v419, %v419
    %v1113 = vmul.f32 %v422, %v422
    %v1114 = vmul.f32 %v427, %v427
    %v1115 = vmul.f32 %v430, %v430
    %v1116 = vmul.f32 %v435, %v435
    %v1117 = vmul.f32 %v438, %v438
    %v1118 = vmul.f32 %v443, %v443
    %v1119 = vmul.f32 %v446, %v446
    %v1120 = vmul.f32 %v451, %v451
    %v1121 = vmul.f32 %v454, %v454
    %v1122 = vmul.f32 %v459, %v459
    %v1123 = vmul.f32 %v462, %v462
    %v1124 = vmul.f32 %v467, %v467
    %v1125 = vmul.f32 %v470, %v470
    %v1126 = vmul.f32 %v475, %v475
    %v1127 = vmul.f32 %v478, %v478
    %v1128 = vmul.f32 %v483, %v483
    %v1129 = vmul.f32 %v486, %v486
    %v1130 = vmul.f32 %v491, %v491
    %v1131 = vmul.f32 %v494, %v494
    %v1132 = vmul.f32 %v499, %v499
    %v1133 = vmul.f32 %v502, %v502
    %v1134 = vmul.f32 %v507, %v507
    %v1135 = vmul.f32 %v510, %v510
    %v1136 = vmul.f32 %v515, %v515
    %v1137 = vmul.f32 %v518, %v518
    %v1138 = vmul.f32 %v523, %v523
    %v1139 = vmul.f32 %v526, %v526
    %v1140 = vmul.f32 %v531, %v531
    %v1141 = vmul.f32 %v534, %v534
    %v1142 = vmul.f32 %v539, %v539
    %v1143 = vmul.f32 %v542, %v542
    %v1144 = vmul.f32 %v547, %v547
    %v1145 = vmul.f32 %v550, %v550
    %v1146 = vmul.f32 %v555, %v555
    %v1147 = vmul.f32 %v558, %v558
    %v1148 = vmul.f32 %v563, %v563
    %v1149 = vmul.f32 %v566, %v566
    %v1150 = vmul.f32 %v571, %v571
    %v1151 = vmul.f32 %v574, %v574
    %v1152 = vmul.f32 %v579, %v579
    %v1153 = vmul.f32 %v582, %v582
    %v1154 = vmul.f32 %v587, %v587
    %v1155 = vmul.f32 %v590, %v590
    %v1156 = vmul.f32 %v595, %v595
    %v1157 = vmul.f32 %v598, %v598
    %v1158 = vmul.f32 %v603, %v603
    %v1159 = vmul.f32 %v606, %v606
    %v1160 = vmul.f32 %v611, %v611
    %v1161 = vmul.f32 %v614, %v614
    %v1162 = vmul.f32 %v619, %v619
    %v1163 = vmul.f32 %v622, %v622
    %v1164 = vmul.f32 %v627, %v627
    %v1165 = vmul.f32 %v630, %v630
    %v1166 = vmul.f32 %v635, %v635
    %v1167 = vmul.f32 %v638, %v638
    %v1168 = vmul.f32 %v643, %v643
    %v1169 = vmul.f32 %v646, %v646
    %v1170 = vsel %vm970, %v1106, 0.0
    %v1171 = vsel %vm970, %v1107, 0.0
    %v1172 = vadd.f32 %v1170, %v1171
    %v1173 = vsel %vm970, %v1108, 0.0
    %v1174 = vadd.f32 %v1172, %v1173
    %v1175 = vsel %vm970, %v1109, 0.0
    %v1176 = vadd.f32 %v1174, %v1175
    %v1177 = vsel %vm970, %v1110, 0.0
    %v1178 = vadd.f32 %v1176, %v1177
    %v1179 = vsel %vm970, %v1111, 0.0
    %v1180 = vadd.f32 %v1178, %v1179
    %v1181 = vsel %vm970, %v1112, 0.0
    %v1182 = vadd.f32 %v1180, %v1181
    %v1183 = vsel %vm970, %v1113, 0.0
    %v1184 = vadd.f32 %v1182, %v1183
    %v1185 = vsel %vm970, %v1114, 0.0
    %v1186 = vadd.f32 %v1184, %v1185
    %v1187 = vsel %vm970, %v1115, 0.0
    %v1188 = vadd.f32 %v1186, %v1187
    %v1189 = vsel %vm970, %v1116, 0.0
    %v1190 = vadd.f32 %v1188, %v1189
    %v1191 = vsel %vm970, %v1117, 0.0
    %v1192 = vadd.f32 %v1190, %v1191
    %v1193 = vsel %vm970, %v1118, 0.0
    %v1194 = vadd.f32 %v1192, %v1193
    %v1195 = vsel %vm970, %v1119, 0.0
    %v1196 = vadd.f32 %v1194, %v1195
    %v1197 = vsel %vm970, %v1120, 0.0
    %v1198 = vadd.f32 %v1196, %v1197
    %v1199 = vsel %vm970, %v1121, 0.0
    %v1200 = vadd.f32 %v1198, %v1199
    %v1201 = vsel %vm970, %v1122, 0.0
    %v1202 = vadd.f32 %v1200, %v1201
    %v1203 = vsel %vm970, %v1123, 0.0
    %v1204 = vadd.f32 %v1202, %v1203
    %v1205 = vsel %vm970, %v1124, 0.0
    %v1206 = vadd.f32 %v1204, %v1205
    %v1207 = vsel %vm970, %v1125, 0.0
    %v1208 = vadd.f32 %v1206, %v1207
    %v1209 = vsel %vm970, %v1126, 0.0
    %v1210 = vadd.f32 %v1208, %v1209
    %v1211 = vsel %vm970, %v1127, 0.0
    %v1212 = vadd.f32 %v1210, %v1211
    %v1213 = vsel %vm970, %v1128, 0.0
    %v1214 = vadd.f32 %v1212, %v1213
    %v1215 = vsel %vm970, %v1129, 0.0
    %v1216 = vadd.f32 %v1214, %v1215
    %v1217 = vsel %vm970, %v1130, 0.0
    %v1218 = vadd.f32 %v1216, %v1217
    %v1219 = vsel %vm970, %v1131, 0.0
    %v1220 = vadd.f32 %v1218, %v1219
    %v1221 = vsel %vm970, %v1132, 0.0
    %v1222 = vadd.f32 %v1220, %v1221
    %v1223 = vsel %vm970, %v1133, 0.0
    %v1224 = vadd.f32 %v1222, %v1223
    %v1225 = vsel %vm970, %v1134, 0.0
    %v1226 = vadd.f32 %v1224, %v1225
    %v1227 = vsel %vm970, %v1135, 0.0
    %v1228 = vadd.f32 %v1226, %v1227
    %v1229 = vsel %vm970, %v1136, 0.0
    %v1230 = vadd.f32 %v1228, %v1229
    %v1231 = vsel %vm970, %v1137, 0.0
    %v1232 = vadd.f32 %v1230, %v1231
    %v1233 = vsel %vm970, %v1138, 0.0
    %v1234 = vadd.f32 %v1232, %v1233
    %v1235 = vsel %vm970, %v1139, 0.0
    %v1236 = vadd.f32 %v1234, %v1235
    %v1237 = vsel %vm970, %v1140, 0.0
    %v1238 = vadd.f32 %v1236, %v1237
    %v1239 = vsel %vm970, %v1141, 0.0
    %v1240 = vadd.f32 %v1238, %v1239
    %v1241 = vsel %vm970, %v1142, 0.0
    %v1242 = vadd.f32 %v1240, %v1241
    %v1243 = vsel %vm970, %v1143, 0.0
    %v1244 = vadd.f32 %v1242, %v1243
    %v1245 = vsel %vm970, %v1144, 0.0
    %v1246 = vadd.f32 %v1244, %v1245
    %v1247 = vsel %vm970, %v1145, 0.0
    %v1248 = vadd.f32 %v1246, %v1247
    %v1249 = vsel %vm970, %v1146, 0.0
    %v1250 = vadd.f32 %v1248, %v1249
    %v1251 = vsel %vm970, %v1147, 0.0
    %v1252 = vadd.f32 %v1250, %v1251
    %v1253 = vsel %vm970, %v1148, 0.0
    %v1254 = vadd.f32 %v1252, %v1253
    %v1255 = vsel %vm970, %v1149, 0.0
    %v1256 = vadd.f32 %v1254, %v1255
    %v1257 = vsel %vm970, %v1150, 0.0
    %v1258 = vadd.f32 %v1256, %v1257
    %v1259 = vsel %vm970, %v1151, 0.0
    %v1260 = vadd.f32 %v1258, %v1259
    %v1261 = vsel %vm970, %v1152, 0.0
    %v1262 = vadd.f32 %v1260, %v1261
    %v1263 = vsel %vm970, %v1153, 0.0
    %v1264 = vadd.f32 %v1262, %v1263
    %v1265 = vsel %vm970, %v1154, 0.0
    %v1266 = vadd.f32 %v1264, %v1265
    %v1267 = vsel %vm970, %v1155, 0.0
    %v1268 = vadd.f32 %v1266, %v1267
    %v1269 = vsel %vm970, %v1156, 0.0
    %v1270 = vadd.f32 %v1268, %v1269
    %v1271 = vsel %vm970, %v1157, 0.0
    %v1272 = vadd.f32 %v1270, %v1271
    %v1273 = vsel %vm970, %v1158, 0.0
    %v1274 = vadd.f32 %v1272, %v1273
    %v1275 = vsel %vm970, %v1159, 0.0
    %v1276 = vadd.f32 %v1274, %v1275
    %v1277 = vsel %vm970, %v1160, 0.0
    %v1278 = vadd.f32 %v1276, %v1277
    %v1279 = vsel %vm970, %v1161, 0.0
    %v1280 = vadd.f32 %v1278, %v1279
    %v1281 = vsel %vm970, %v1162, 0.0
    %v1282 = vadd.f32 %v1280, %v1281
    %v1283 = vsel %vm970, %v1163, 0.0
    %v1284 = vadd.f32 %v1282, %v1283
    %v1285 = vsel %vm970, %v1164, 0.0
    %v1286 = vadd.f32 %v1284, %v1285
    %v1287 = vsel %vm970, %v1165, 0.0
    %v1288 = vadd.f32 %v1286, %v1287
    %v1289 = vsel %vm970, %v1166, 0.0
    %v1290 = vadd.f32 %v1288, %v1289
    %v1291 = vsel %vm970, %v1167, 0.0
    %v1292 = vadd.f32 %v1290, %v1291
    %v1293 = vsel %vm970, %v1168, 0.0
    %v1294 = vadd.f32 %v1292, %v1293
    %v1295 = vsel %vm970, %v1169, 0.0
    %v1296 = vadd.f32 %v1294, %v1295
    %v1297 = vrot.slane %v1296, 4
    %v1298 = vadd.f32 %v1296, %v1297
    %v1299 = vrot.slane %v1298, 2
    %v1300 = vadd.f32 %v1298, %v1299
    %v1301 = vrot.slane %v1300, 1
    %v1302 = vadd.f32 %v1300, %v1301
    %1303 = vst.msk [vmem:[#allocation4] sm:$0x1] %vm1104, %v1302
    // Predicated region
    $region10: #{tpu_custom_call.1} parent=1 // pred_check
      _
    $region11: #{tpu_custom_call.1} parent=1 // pred_check_branch
      %1305 = sbr.rel (0) target = $region13
    $region12: #{tpu_custom_call.1} parent=1 // pred_region
      _
    $region13: #{tpu_custom_call.1} parent=1 // pred_fallthru
      _
    // Predicated region
    $region14: #{tpu_custom_call.1} parent=1 // pred_check
      _
    $region15: #{tpu_custom_call.1} parent=1 // pred_check_branch
      %1307 = sbr.rel (0) target = $region17
    $region16: #{tpu_custom_call.1} parent=1 // pred_region
      %s1309 = ssub.s32 16, 16
      %1310 = vsyncadd [#allocation3], %s1309
      %s1312 = sshll.u32 [#allocation2], 4
      %s1313 = int_to_ptr.vmem [resolvable:$true] %s1312
      %1315 = dma.vmem_to_hbm [thread:$0]  %s1313, 16, %s3, [#allocation3]
    $region17: #{tpu_custom_call.1} parent=1 // pred_fallthru
      _
    // Predicated region
    $region18: #{tpu_custom_call.1} parent=1 // pred_check
      _
    $region19: #{tpu_custom_call.1} parent=1 // pred_check_branch
      %1317 = sbr.rel (0) target = $region21
    $region20: #{tpu_custom_call.1} parent=1 // pred_region
      %s1319 = ssub.s32 16, 16
      %1320 = vsyncadd [#allocation5], %s1319
      %s1322 = sshll.u32 [#allocation4], 4
      %s1323 = int_to_ptr.vmem [resolvable:$true] %s1322
      %1325 = dma.vmem_to_hbm [thread:$0]  %s1323, 16, %s4, [#allocation5]
    $region21: #{tpu_custom_call.1} parent=1 // pred_fallthru
      _
    // Predicated region
    $region22: #{tpu_custom_call.1} parent=1 // pred_check
      _
    $region23: #{tpu_custom_call.1} parent=1 // pred_check_branch
      %1327 = sbr.rel (0) target = $region25
    $region24: #{tpu_custom_call.1} parent=1 // pred_region
      _
    $region25: #{tpu_custom_call.1} parent=1 // pred_fallthru
      _
    // Predicated region
    $region26: #{tpu_custom_call.1} parent=1 // pred_check
      _
    $region27: #{tpu_custom_call.1} parent=1 // pred_check_branch
      %1329 = sbr.rel (0) target = $region29
    $region28: #{tpu_custom_call.1} parent=1 // pred_region
      %1330 = dma.done [#allocation3], 16
    $region29: #{tpu_custom_call.1} parent=1 // pred_fallthru
      _
    // Predicated region
    $region30: #{tpu_custom_call.1} parent=1 // pred_check
      _
    $region31: #{tpu_custom_call.1} parent=1 // pred_check_branch
      %1332 = sbr.rel (0) target = $region33
    $region32: #{tpu_custom_call.1} parent=1 // pred_region
      %1333 = dma.done [#allocation5], 16
    $region33: #{tpu_custom_call.1} parent=1 // pred_fallthru
      _
    %1334 = vsyncpa [#allocation3], 1
    %1335 = vsyncpa [#allocation5], 1

</llo_original>
